<compile_context>
chip_gen: v6e
topology: v6e:2x2x1
jax: 0.10.0
libtpu: 0.0.40
codegen_flags: <defaults>
</compile_context>

<pallas_src>
import functools

import numpy as np
import jax
import jax.numpy as jnp
from jax import lax
from jax.experimental import pallas as pl
from jax.experimental.pallas import tpu as pltpu


# ----------------------------- Pallas kernel --------------------------------
def _flow_kernel(n_layers, kernel_size, dilation_rate, hidden,
                 x_ref, keep_ref,
                 pre_w_ref, pre_b_ref, in_w_ref, in_b_ref,
                 rs_w_ref, rs_b_ref, post_w_ref, post_b_ref, sel_ref,
                 out_ref):
    H, K, L = hidden, kernel_size, n_layers
    f = pl.program_id(1)                        # flow index ("arbitrary", inner)

    # Seed the resident (C, Nb) state from the input on the first flow of this
    # lane tile; out_ref keeps the same block index across the flow axis, so it
    # stays in VMEM as the running state (no HBM round trips between flows).
    @pl.when(f == 0)
    def _():
        out_ref[...] = x_ref[...]

    state = out_ref[...].astype(jnp.float32)    # (C, Nb)
    C, Nb = state.shape
    keep = keep_ref[...]                        # (1, Nb): 1 = valid, 0 = pad/masked

    # --- pre 1x1 conv (C -> H).  The Flip is folded into pre_w: only the
    # columns of the current "driver" half are nonzero (channel-reversed on odd
    # flows).  Tiny contraction (self-test C=4) stays on the VPU; production
    # half sizes go through the MXU in bf16.
    if C <= 8:
        pw = pre_w_ref[...].astype(jnp.float32)
        h = pw[:, 0:1] * state[0:1, :]
        for c in range(1, C):
            h = h + pw[:, c:c + 1] * state[c:c + 1, :]
    else:
        h = jnp.dot(pre_w_ref[...], state.astype(jnp.bfloat16),
                    preferred_element_type=jnp.float32)
    h = (h + pre_b_ref[...]) * keep             # (H, Nb), zero on pad lanes

    # --- WN encoder (gin_channels == 0 -> g_l == 0; dropout p == 0).
    # Each dilated conv is ONE deep-contraction matmul (2H, K*H) @ (K*H, Nb);
    # the K taps are lane rolls (XLU).  h is zero on every pad lane and the
    # wrapper pads each sequence by >= the conv halo, so rolled taps reproduce
    # Conv1d zero padding without per-tap validity masks.
    # TODO(synk): on v5e write the K taps into a (K*H, Nb) VMEM scratch (or use
    # K accumulating matmuls) to relieve the single vector-store slot.
    out_acc = jnp.zeros((H, Nb), jnp.float32)
    for i in range(L):
        d = dilation_rate ** i
        pad = (K * d - d) // 2
        taps = []
        for j in range(K):
            o = j * d - pad                     # tap reads h[:, n + o]
            t = h if o == 0 else pltpu.roll(h, shift=(-o) % Nb, axis=1)
            taps.append(t.astype(jnp.bfloat16))
        stacked = jnp.concatenate(taps, axis=0)                    # (K*H, Nb)
        x_in = jnp.dot(in_w_ref[i], stacked,
                       preferred_element_type=jnp.float32) + in_b_ref[i]
        acts = jnp.tanh(x_in[:H, :]) * jax.nn.sigmoid(x_in[H:, :])
        rs = jnp.dot(rs_w_ref[i], acts.astype(jnp.bfloat16),
                     preferred_element_type=jnp.float32) + rs_b_ref[i]
        if i < L - 1:
            h = (h + rs[:H, :]) * keep
        out_acc = out_acc + rs[H:, :]           # last layer is skip-only

    # --- post 1x1 conv (H -> C).  post_w packed to full C output rows with the
    # Flip / target-half permutation folded in; pass-through rows are zero.
    # mean_only -> logs == 0 -> exp(logs).masked_fill == keep.
    stats = (jnp.dot(post_w_ref[...], out_acc.astype(jnp.bfloat16),
                     preferred_element_type=jnp.float32)
             + post_b_ref[...]) * keep                             # (C, Nb)
    gate = 1.0 - sel_ref[...] * (1.0 - keep)    # 1 on pass-through, keep on updated
    out_ref[...] = (state * gate + stats).astype(out_ref.dtype)


# ----------------------------- weight packing --------------------------------
def _pack_params(flow_params, cfg):
    """Stack per-flow weights, fold the interleaved Flips into them (bf16)."""
    H, K, L = cfg["hidden_channels"], cfg["kernel_size"], cfg["n_layers"]
    C = cfg["channels"]
    half = C // 2
    pre_w, pre_b, in_w, in_b = [], [], [], []
    rs_w, rs_b, post_w, post_b, sel = [], [], [], [], []
    for fi, p in enumerate(flow_params):
        pw = jnp.zeros((H, C), jnp.float32)
        qw = jnp.zeros((C, H), jnp.float32)
        qb = jnp.zeros((C, 1), jnp.float32)
        s = jnp.zeros((C, 1), jnp.float32)
        if fi % 2 == 0:
            # driver = rows [0, half) (identity); update rows [half, C).
            pw = pw.at[:, :half].set(p["pre_w"])
            qw = qw.at[half:, :].set(p["post_w"])
            qb = qb.at[half:, :].set(p["post_b"])
            s = s.at[half:, :].set(1.0)
        else:
            # driver = channel-reversed rows [half, C); update rows [0, half)
            # with channel-reversed m  (this is the folded Flip).
            pw = pw.at[:, half:].set(p["pre_w"][:, ::-1])
            qw = qw.at[:half, :].set(p["post_w"][::-1, :])
            qb = qb.at[:half, :].set(p["post_b"][::-1, :])
            s = s.at[:half, :].set(1.0)
        pre_w.append(pw); post_w.append(qw); post_b.append(qb); sel.append(s)
        pre_b.append(p["pre_b"])
        # torch tap layout (L, K, 2H, H) -> deep-contraction layout (L, 2H, K*H)
        in_w.append(jnp.transpose(p["in_w"], (0, 2, 1, 3)).reshape(L, 2 * H, K * H))
        in_b.append(p["in_b"])
        rs_w.append(p["rs_w"]); rs_b.append(p["rs_b"])
    f32 = lambda xs: jnp.stack(xs, 0).astype(jnp.float32)
    b16 = lambda xs: jnp.stack(xs, 0).astype(jnp.bfloat16)
    return dict(pre_w=b16(pre_w), pre_b=f32(pre_b),
                in_w=b16(in_w), in_b=f32(in_b),
                rs_w=b16(rs_w), rs_b=f32(rs_b),
                post_w=b16(post_w), post_b=f32(post_b), sel=f32(sel))


# ----------------------------- wrapper ---------------------------------------
def flow_fwd(x, x_mask, flow_params, cfg):
    """Flow.forward(reverse=False); logdets (discarded by Flow) omitted.

    x_mask follows the module's masked_fill convention: nonzero = padding frame.
    """
    B, C, T = x.shape
    H, K, L = cfg["hidden_channels"], cfg["kernel_size"], cfg["n_layers"]
    dr = cfg["dilation_rate"]
    F = len(flow_params)
    packed = _pack_params(flow_params, cfg)

    # Pad every sequence's time axis so (a) dilated-conv taps that run off a
    # sequence read zeros (replaces per-tap validity masks) and (b) lane tiles
    # are 128-dense.
    halo = max(((K - 1) * dr ** i) // 2 for i in range(L))
    LANE = 128
    T_pad = -(-(T + halo) // LANE) * LANE
    N = B * T_pad

    xp = jnp.pad(x, ((0, 0), (0, 0), (0, T_pad - T)))
    x2 = jnp.transpose(xp, (1, 0, 2)).reshape(C, N)          # (C, B*T_pad)
    keep = (x_mask <= 0).astype(jnp.float32)                 # 1 = valid frame
    keep = jnp.pad(keep, ((0, 0), (0, 0), (0, T_pad - T)))   # pad lanes -> 0
    keep2 = jnp.transpose(keep, (1, 0, 2)).reshape(1, N)

    # Lane tile: whole padded sequences per block; >=256 lanes when B allows
    # (fills the 256-wide MXU on v6e/v7x).  Sequence tiles are independent, so
    # the leading grid axis is "parallel" (megacore sharding on v7x).
    spb = 1
    while spb * 2 <= B and B % (spb * 2) == 0 and spb * T_pad < 256:
        spb *= 2
    Nb = spb * T_pad
    G = N // Nb

    state_spec = pl.BlockSpec((C, Nb), lambda g, f: (0, g))
    keep_spec = pl.BlockSpec((1, Nb), lambda g, f: (0, g))

    def wspec(*dims):   # per-flow weight block, streamed along the flow axis
        return pl.BlockSpec((None,) + dims, lambda g, f: (f,) + (0,) * len(dims))

    in_specs = [
        state_spec, keep_spec,
        wspec(H, C), wspec(H, 1),                      # pre_w, pre_b
        wspec(L, 2 * H, K * H), wspec(L, 2 * H, 1),    # in_w, in_b
        wspec(L, 2 * H, H), wspec(L, 2 * H, 1),        # rs_w, rs_b
        wspec(C, H), wspec(C, 1),                      # post_w, post_b
        wspec(C, 1),                                   # sel
    ]
    operands = (x2, keep2,
                packed["pre_w"], packed["pre_b"],
                packed["in_w"], packed["in_b"],
                packed["rs_w"], packed["rs_b"],
                packed["post_w"], packed["post_b"], packed["sel"])

    # VMEM budget from actual block sizes (+ workspace estimate + headroom).
    per_flow_w = sum(int(np.prod(v.shape[1:])) * v.dtype.itemsize
                     for v in packed.values())
    blocks = 2 * (per_flow_w + (2 * C + 1) * Nb * 4)     # double-buffered I/O
    work = Nb * 4 * (2 * K * H + 10 * H + 4 * C)         # stacked/x_in/acts/...
    vmem_limit = int(min(64 << 20, max(32 << 20, 2 * (blocks + work) + (4 << 20))))

    kern = functools.partial(_flow_kernel, L, K, dr, H)
    y2 = pl.pallas_call(
        kern,
        grid=(G, F),
        in_specs=in_specs,
        out_specs=pl.BlockSpec((C, Nb), lambda g, f: (0, g)),
        out_shape=jax.ShapeDtypeStruct((C, N), x.dtype),
        compiler_params=pltpu.CompilerParams(
            dimension_semantics=("parallel", "arbitrary"),
            vmem_limit_bytes=vmem_limit),
    )(*operands)

    y = jnp.transpose(y2.reshape(C, B, T_pad), (1, 0, 2))[:, :, :T]
    if F % 2 == 1:
        y = jnp.flip(y, axis=1)      # leftover parity of the folded Flips
    return y
    # TODO(synk): for production T (thousands) add a T-tile "parallel" axis with
    # per-flow conv halos (overlap or recompute) instead of batch-only tiling,
    # and re-derive Nb / vmem_limit per chip via pltpu.get_tpu_info().


# ----------------------------- parameters ------------------------------------
def init_params(key, cfg, n_flows):
    C, H = cfg["channels"], cfg["hidden_channels"]
    L, K = cfg["n_layers"], cfg["kernel_size"]
    half = C // 2
    scale = 0.1
    flows = []
    for _ in range(n_flows):
        key, *ks = jax.random.split(key, 9)
        rs_w = jax.random.normal(ks[4], (L, 2 * H, H), jnp.float32) * scale
        rs_b = jax.random.normal(ks[5], (L, 2 * H, 1), jnp.float32) * scale
        # last res_skip layer only has `hidden` output channels (skip-only):
        # pack them into rows [H:2H) and zero unused rows.
        rs_w = rs_w.at[L - 1, :H, :].set(0.0)
        rs_b = rs_b.at[L - 1, :H, :].set(0.0)
        flows.append(dict(
            pre_w=jax.random.normal(ks[0], (H, half), jnp.float32) * scale,
            pre_b=jax.random.normal(ks[1], (H, 1), jnp.float32) * scale,
            in_w=jax.random.normal(ks[2], (L, K, 2 * H, H), jnp.float32) * scale,
            in_b=jax.random.normal(ks[3], (L, 2 * H, 1), jnp.float32) * scale,
            rs_w=rs_w,
            rs_b=rs_b,
            # NOTE: PyTorch zero-inits `post`; deterministic nonzero values are
            # used here so the kernel path is actually exercised.
            post_w=jax.random.normal(ks[6], (half, H), jnp.float32) * scale,
            post_b=jax.random.normal(ks[7], (half, 1), jnp.float32) * scale,
        ))
    return flows


# ------------------------- pure-JAX reference check --------------------------
def _ref_coupling(x, mask, p, cfg):
    H, L = cfg["hidden_channels"], cfg["n_layers"]
    K, dr = cfg["kernel_size"], cfg["dilation_rate"]
    half = x.shape[1] // 2
    x0, x1 = x[:, :half], x[:, half:]
    mfill = lambda v: jnp.where(mask > 0.0, 0.0, v)
    h = mfill(jnp.einsum("oc,bct->bot", p["pre_w"], x0) + p["pre_b"][None])
    out = jnp.zeros_like(h)
    for i in range(L):
        d = dr ** i
        pad = (K * d - d) // 2
        w = jnp.transpose(p["in_w"][i], (1, 2, 0))       # torch OIW (2H, H, K)
        x_in = lax.conv_general_dilated(
            h, w, window_strides=(1,), padding=[(pad, pad)],
            rhs_dilation=(d,), dimension_numbers=("NCW", "OIW", "NCW"))
        x_in = x_in + p["in_b"][i][None]
        acts = jnp.tanh(x_in[:, :H]) * jax.nn.sigmoid(x_in[:, H:])
        rs = jnp.einsum("oc,bct->bot", p["rs_w"][i], acts) + p["rs_b"][i][None]
        if i < L - 1:
            h = mfill(h + rs[:, :H])
            out = out + rs[:, H:]
        else:
            out = out + rs[:, H:]
    out = mfill(out)
    m = mfill(jnp.einsum("oc,bct->bot", p["post_w"], out) + p["post_b"][None])
    x1 = m + x1 * mfill(jnp.ones_like(x1))
    return jnp.concatenate([x0, x1], axis=1)


def _ref_flow(x, mask, flow_params, cfg):
    for p in flow_params:
        x = _ref_coupling(x, mask, p, cfg)
        x = jnp.flip(x, axis=1)
    return x


# ----------------------------------- main -------------------------------------
if __name__ == "__main__":
    cfg = dict(channels=4, hidden_channels=32, kernel_size=5,
               dilation_rate=1, n_layers=3)
    n_flows = 4
    B, C, T = 4, cfg["channels"], 64

    key = jax.random.PRNGKey(0)
    kx, kp = jax.random.split(key)
    x = jax.random.normal(kx, (B, C, T), jnp.float32)

    # x_mask: 1.0 where masked_fill applies (padding frames), 0.0 where valid
    lengths = jnp.array([T, 40, T, 25], jnp.int32)
    t_idx = jnp.arange(T, dtype=jnp.int32)[None, None, :]
    x_mask = (t_idx >= lengths[:, None, None]).astype(jnp.float32)  # (B, 1, T)

    flow_params = init_params(kp, cfg, n_flows)

    run = jax.jit(lambda xx, mm: flow_fwd(xx, mm, flow_params, cfg))
    y = run(x, x_mask)
    jax.block_until_ready(y)

    y_ref = _ref_flow(x, x_mask, flow_params, cfg)
    # bf16 MXU operands vs f32 reference -> loosened (but structure-catching)
    # tolerance; structural errors (flip folding, taps, masking) are O(1).
    np.testing.assert_allclose(np.asarray(y), np.asarray(y_ref),
                               rtol=3e-2, atol=3e-2)
    print("KERNEL_OK")
</pallas_src>

<mosaic_0001>
module attributes {stable_mosaic.version = 11 : i64} {
  func.func @_flow_kernel(%arg0: i32, %arg1: i32, %arg2: memref<4x256xf32, #tpu.memory_space<vmem>>, %arg3: memref<1x256xf32, #tpu.memory_space<vmem>>, %arg4: memref<1x32x4xbf16, #tpu.memory_space<vmem>>, %arg5: memref<1x32x1xf32, #tpu.memory_space<vmem>>, %arg6: memref<1x3x64x160xbf16, #tpu.memory_space<vmem>>, %arg7: memref<1x3x64x1xf32, #tpu.memory_space<vmem>>, %arg8: memref<1x3x64x32xbf16, #tpu.memory_space<vmem>>, %arg9: memref<1x3x64x1xf32, #tpu.memory_space<vmem>>, %arg10: memref<1x4x32xbf16, #tpu.memory_space<vmem>>, %arg11: memref<1x4x1xf32, #tpu.memory_space<vmem>>, %arg12: memref<1x4x1xf32, #tpu.memory_space<vmem>>, %arg13: memref<4x256xf32, #tpu.memory_space<vmem>>) attributes {dimension_semantics = [#tpu.dimension_semantics<parallel>, #tpu.dimension_semantics<arbitrary>], iteration_bounds = array<i64: 2, 4>, scalar_prefetch = 0 : i64, scratch_operands = 0 : i64, tpu.core_type = #tpu.core_type<tc>, window_params = [{transform_indices = @transform_0, window_bounds = array<i64: 4, 256>}, {transform_indices = @transform_1, window_bounds = array<i64: 1, 256>}, {transform_indices = @transform_2, window_bounds = array<i64: 1, 32, 4>}, {transform_indices = @transform_3, window_bounds = array<i64: 1, 32, 1>}, {transform_indices = @transform_4, window_bounds = array<i64: 1, 3, 64, 160>}, {transform_indices = @transform_5, window_bounds = array<i64: 1, 3, 64, 1>}, {transform_indices = @transform_6, window_bounds = array<i64: 1, 3, 64, 32>}, {transform_indices = @transform_7, window_bounds = array<i64: 1, 3, 64, 1>}, {transform_indices = @transform_8, window_bounds = array<i64: 1, 4, 32>}, {transform_indices = @transform_9, window_bounds = array<i64: 1, 4, 1>}, {transform_indices = @transform_10, window_bounds = array<i64: 1, 4, 1>}, {transform_indices = @transform_11, window_bounds = array<i64: 4, 256>}]} {
    %c0_i32 = arith.constant 0 : i32
    %0 = arith.cmpi eq, %arg1, %c0_i32 : i32
    %1 = arith.extui %0 : i1 to i32
    %c0_i32_0 = arith.constant 0 : i32
    %2 = arith.cmpi ne, %1, %c0_i32_0 : i32
    scf.if %2 {
      %c0_87 = arith.constant 0 : index
      %c0_88 = arith.constant 0 : index
      %176 = vector.load %arg2[%c0_87, %c0_88] : memref<4x256xf32, #tpu.memory_space<vmem>>, vector<4x256xf32>
      %c0_89 = arith.constant 0 : index
      %c0_90 = arith.constant 0 : index
      %177 = vector.load %arg13[%c0_89, %c0_90] : memref<4x256xf32, #tpu.memory_space<vmem>>, vector<4x256xf32>
      tpu.vector_store %arg13[%c0_89, %c0_90], %176 {strides = array<i32>} : memref<4x256xf32, #tpu.memory_space<vmem>>, vector<4x256xf32>,
    } else {
    }
    %c0 = arith.constant 0 : index
    %c0_1 = arith.constant 0 : index
    %3 = vector.load %arg13[%c0, %c0_1] : memref<4x256xf32, #tpu.memory_space<vmem>>, vector<4x256xf32>
    %c0_2 = arith.constant 0 : index
    %c0_3 = arith.constant 0 : index
    %4 = vector.load %arg3[%c0_2, %c0_3] : memref<1x256xf32, #tpu.memory_space<vmem>>, vector<1x256xf32>
    %c0_4 = arith.constant 0 : index
    %c0_5 = arith.constant 0 : index
    %c0_6 = arith.constant 0 : index
    %5 = vector.load %arg4[%c0_4, %c0_5, %c0_6] : memref<1x32x4xbf16, #tpu.memory_space<vmem>>, vector<1x32x4xbf16>
    %6 = vector.shape_cast %5 : vector<1x32x4xbf16> to vector<32x4xbf16>
    %7 = arith.extf %6 : vector<32x4xbf16> to vector<32x4xf32>
    %8 = vector.extract_strided_slice %7 {offsets = [0, 0], sizes = [32, 1], strides = [1, 1]} : vector<32x4xf32> to vector<32x1xf32>
    %9 = vector.extract_strided_slice %3 {offsets = [0, 0], sizes = [1, 256], strides = [1, 1]} : vector<4x256xf32> to vector<1x256xf32>
    %10 = vector.broadcast %8 : vector<32x1xf32> to vector<32x256xf32>
    %11 = vector.broadcast %9 : vector<1x256xf32> to vector<32x256xf32>
    %12 = arith.mulf %10, %11 : vector<32x256xf32>
    %13 = vector.extract_strided_slice %7 {offsets = [0, 1], sizes = [32, 1], strides = [1, 1]} : vector<32x4xf32> to vector<32x1xf32>
    %14 = vector.extract_strided_slice %3 {offsets = [1, 0], sizes = [1, 256], strides = [1, 1]} : vector<4x256xf32> to vector<1x256xf32>
    %15 = vector.broadcast %13 : vector<32x1xf32> to vector<32x256xf32>
    %16 = vector.broadcast %14 : vector<1x256xf32> to vector<32x256xf32>
    %17 = arith.mulf %15, %16 : vector<32x256xf32>
    %18 = arith.addf %12, %17 : vector<32x256xf32>
    %19 = vector.extract_strided_slice %7 {offsets = [0, 2], sizes = [32, 1], strides = [1, 1]} : vector<32x4xf32> to vector<32x1xf32>
    %20 = vector.extract_strided_slice %3 {offsets = [2, 0], sizes = [1, 256], strides = [1, 1]} : vector<4x256xf32> to vector<1x256xf32>
    %21 = vector.broadcast %19 : vector<32x1xf32> to vector<32x256xf32>
    %22 = vector.broadcast %20 : vector<1x256xf32> to vector<32x256xf32>
    %23 = arith.mulf %21, %22 : vector<32x256xf32>
    %24 = arith.addf %18, %23 : vector<32x256xf32>
    %25 = vector.extract_strided_slice %7 {offsets = [0, 3], sizes = [32, 1], strides = [1, 1]} : vector<32x4xf32> to vector<32x1xf32>
    %26 = vector.extract_strided_slice %3 {offsets = [3, 0], sizes = [1, 256], strides = [1, 1]} : vector<4x256xf32> to vector<1x256xf32>
    %27 = vector.broadcast %25 : vector<32x1xf32> to vector<32x256xf32>
    %28 = vector.broadcast %26 : vector<1x256xf32> to vector<32x256xf32>
    %29 = arith.mulf %27, %28 : vector<32x256xf32>
    %30 = arith.addf %24, %29 : vector<32x256xf32>
    %c0_7 = arith.constant 0 : index
    %c0_8 = arith.constant 0 : index
    %c0_9 = arith.constant 0 : index
    %31 = vector.load %arg5[%c0_7, %c0_8, %c0_9] : memref<1x32x1xf32, #tpu.memory_space<vmem>>, vector<1x32x1xf32>
    %32 = vector.shape_cast %31 : vector<1x32x1xf32> to vector<32x1xf32>
    %33 = vector.broadcast %32 : vector<32x1xf32> to vector<32x256xf32>
    %34 = arith.addf %30, %33 : vector<32x256xf32>
    %35 = vector.broadcast %4 : vector<1x256xf32> to vector<32x256xf32>
    %36 = arith.mulf %34, %35 : vector<32x256xf32>
    %cst = arith.constant 0.000000e+00 : f32
    %37 = vector.broadcast %cst : f32 to vector<32x256xf32>
    %c2_i32 = arith.constant 2 : i32
    %38 = tpu.dynamic_rotate %36 by %c2_i32 dim 1 : vector<32x256xf32>, i32 -> vector<32x256xf32>
    %39 = arith.truncf %38 : vector<32x256xf32> to vector<32x256xbf16>
    %c1_i32 = arith.constant 1 : i32
    %40 = tpu.dynamic_rotate %36 by %c1_i32 dim 1 : vector<32x256xf32>, i32 -> vector<32x256xf32>
    %41 = arith.truncf %40 : vector<32x256xf32> to vector<32x256xbf16>
    %42 = arith.truncf %36 : vector<32x256xf32> to vector<32x256xbf16>
    %c255_i32 = arith.constant 255 : i32
    %43 = tpu.dynamic_rotate %36 by %c255_i32 dim 1 : vector<32x256xf32>, i32 -> vector<32x256xf32>
    %44 = arith.truncf %43 : vector<32x256xf32> to vector<32x256xbf16>
    %c254_i32 = arith.constant 254 : i32
    %45 = tpu.dynamic_rotate %36 by %c254_i32 dim 1 : vector<32x256xf32>, i32 -> vector<32x256xf32>
    %46 = arith.truncf %45 : vector<32x256xf32> to vector<32x256xbf16>
    %47 = tpu.concatenate %39, %41, %42, %44, %46 in 0 : vector<32x256xbf16>, vector<32x256xbf16>, vector<32x256xbf16>, vector<32x256xbf16>, vector<32x256xbf16> -> vector<160x256xbf16>
    %c0_10 = arith.constant 0 : index
    %c0_11 = arith.constant 0 : index
    %c0_12 = arith.constant 0 : index
    %c0_13 = arith.constant 0 : index
    %48 = vector.load %arg6[%c0_10, %c0_11, %c0_12, %c0_13] : memref<1x3x64x160xbf16, #tpu.memory_space<vmem>>, vector<1x1x64x160xbf16>
    %49 = vector.shape_cast %48 : vector<1x1x64x160xbf16> to vector<64x160xbf16>
    %cst_14 = arith.constant dense<0.000000e+00> : vector<64x256xf32>
    %50 = tpu.matmul %49, %47, %cst_14 {dimension_numbers = #tpu.dot_dimension_numbers<[1], [0], [0], [1], [0, 0, 1, 1], [], []>} : vector<64x160xbf16>, vector<160x256xbf16>, vector<64x256xf32> -> vector<64x256xf32>
    %c0_15 = arith.constant 0 : index
    %c0_16 = arith.constant 0 : index
    %c0_17 = arith.constant 0 : index
    %c0_18 = arith.constant 0 : index
    %51 = vector.load %arg7[%c0_15, %c0_16, %c0_17, %c0_18] : memref<1x3x64x1xf32, #tpu.memory_space<vmem>>, vector<1x1x64x1xf32>
    %52 = vector.shape_cast %51 : vector<1x1x64x1xf32> to vector<64x1xf32>
    %53 = vector.broadcast %52 : vector<64x1xf32> to vector<64x256xf32>
    %54 = arith.addf %50, %53 : vector<64x256xf32>
    %55 = vector.extract_strided_slice %54 {offsets = [0, 0], sizes = [32, 256], strides = [1, 1]} : vector<64x256xf32> to vector<32x256xf32>
    %56 = math.tanh %55 : vector<32x256xf32>
    %57 = vector.extract_strided_slice %54 {offsets = [32, 0], sizes = [32, 256], strides = [1, 1]} : vector<64x256xf32> to vector<32x256xf32>
    %58 = arith.negf %57 : vector<32x256xf32>
    %59 = math.exp %58 : vector<32x256xf32>
    %cst_19 = arith.constant 1.000000e+00 : f32
    %60 = vector.broadcast %cst_19 : f32 to vector<32x256xf32>
    %61 = arith.addf %60, %59 : vector<32x256xf32>
    %62 = arith.divf %60, %61 : vector<32x256xf32>
    %63 = arith.mulf %56, %62 : vector<32x256xf32>
    %c0_20 = arith.constant 0 : index
    %c0_21 = arith.constant 0 : index
    %c0_22 = arith.constant 0 : index
    %c0_23 = arith.constant 0 : index
    %64 = vector.load %arg8[%c0_20, %c0_21, %c0_22, %c0_23] : memref<1x3x64x32xbf16, #tpu.memory_space<vmem>>, vector<1x1x64x32xbf16>
    %65 = vector.shape_cast %64 : vector<1x1x64x32xbf16> to vector<64x32xbf16>
    %66 = arith.truncf %63 : vector<32x256xf32> to vector<32x256xbf16>
    %cst_24 = arith.constant dense<0.000000e+00> : vector<64x256xf32>
    %67 = tpu.matmul %65, %66, %cst_24 {dimension_numbers = #tpu.dot_dimension_numbers<[1], [0], [0], [1], [0, 0, 1, 1], [], []>} : vector<64x32xbf16>, vector<32x256xbf16>, vector<64x256xf32> -> vector<64x256xf32>
    %c0_25 = arith.constant 0 : index
    %c0_26 = arith.constant 0 : index
    %c0_27 = arith.constant 0 : index
    %c0_28 = arith.constant 0 : index
    %68 = vector.load %arg9[%c0_25, %c0_26, %c0_27, %c0_28] : memref<1x3x64x1xf32, #tpu.memory_space<vmem>>, vector<1x1x64x1xf32>
    %69 = vector.shape_cast %68 : vector<1x1x64x1xf32> to vector<64x1xf32>
    %70 = vector.broadcast %69 : vector<64x1xf32> to vector<64x256xf32>
    %71 = arith.addf %67, %70 : vector<64x256xf32>
    %72 = vector.extract_strided_slice %71 {offsets = [0, 0], sizes = [32, 256], strides = [1, 1]} : vector<64x256xf32> to vector<32x256xf32>
    %73 = arith.addf %36, %72 : vector<32x256xf32>
    %74 = vector.broadcast %4 : vector<1x256xf32> to vector<32x256xf32>
    %75 = arith.mulf %73, %74 : vector<32x256xf32>
    %76 = vector.extract_strided_slice %71 {offsets = [32, 0], sizes = [32, 256], strides = [1, 1]} : vector<64x256xf32> to vector<32x256xf32>
    %77 = arith.addf %37, %76 : vector<32x256xf32>
    %c2_i32_29 = arith.constant 2 : i32
    %78 = tpu.dynamic_rotate %75 by %c2_i32_29 dim 1 : vector<32x256xf32>, i32 -> vector<32x256xf32>
    %79 = arith.truncf %78 : vector<32x256xf32> to vector<32x256xbf16>
    %c1_i32_30 = arith.constant 1 : i32
    %80 = tpu.dynamic_rotate %75 by %c1_i32_30 dim 1 : vector<32x256xf32>, i32 -> vector<32x256xf32>
    %81 = arith.truncf %80 : vector<32x256xf32> to vector<32x256xbf16>
    %82 = arith.truncf %75 : vector<32x256xf32> to vector<32x256xbf16>
    %c255_i32_31 = arith.constant 255 : i32
    %83 = tpu.dynamic_rotate %75 by %c255_i32_31 dim 1 : vector<32x256xf32>, i32 -> vector<32x256xf32>
    %84 = arith.truncf %83 : vector<32x256xf32> to vector<32x256xbf16>
    %c254_i32_32 = arith.constant 254 : i32
    %85 = tpu.dynamic_rotate %75 by %c254_i32_32 dim 1 : vector<32x256xf32>, i32 -> vector<32x256xf32>
    %86 = arith.truncf %85 : vector<32x256xf32> to vector<32x256xbf16>
    %87 = tpu.concatenate %79, %81, %82, %84, %86 in 0 : vector<32x256xbf16>, vector<32x256xbf16>, vector<32x256xbf16>, vector<32x256xbf16>, vector<32x256xbf16> -> vector<160x256xbf16>
    %c0_33 = arith.constant 0 : index
    %c1 = arith.constant 1 : index
    %c0_34 = arith.constant 0 : index
    %c0_35 = arith.constant 0 : index
    %88 = vector.load %arg6[%c0_33, %c1, %c0_34, %c0_35] : memref<1x3x64x160xbf16, #tpu.memory_space<vmem>>, vector<1x1x64x160xbf16>
    %89 = vector.shape_cast %88 : vector<1x1x64x160xbf16> to vector<64x160xbf16>
    %cst_36 = arith.constant dense<0.000000e+00> : vector<64x256xf32>
    %90 = tpu.matmul %89, %87, %cst_36 {dimension_numbers = #tpu.dot_dimension_numbers<[1], [0], [0], [1], [0, 0, 1, 1], [], []>} : vector<64x160xbf16>, vector<160x256xbf16>, vector<64x256xf32> -> vector<64x256xf32>
    %c0_37 = arith.constant 0 : index
    %c1_38 = arith.constant 1 : index
    %c0_39 = arith.constant 0 : index
    %c0_40 = arith.constant 0 : index
    %91 = vector.load %arg7[%c0_37, %c1_38, %c0_39, %c0_40] : memref<1x3x64x1xf32, #tpu.memory_space<vmem>>, vector<1x1x64x1xf32>
    %92 = vector.shape_cast %91 : vector<1x1x64x1xf32> to vector<64x1xf32>
    %93 = vector.broadcast %92 : vector<64x1xf32> to vector<64x256xf32>
    %94 = arith.addf %90, %93 : vector<64x256xf32>
    %95 = vector.extract_strided_slice %94 {offsets = [0, 0], sizes = [32, 256], strides = [1, 1]} : vector<64x256xf32> to vector<32x256xf32>
    %96 = math.tanh %95 : vector<32x256xf32>
    %97 = vector.extract_strided_slice %94 {offsets = [32, 0], sizes = [32, 256], strides = [1, 1]} : vector<64x256xf32> to vector<32x256xf32>
    %98 = arith.negf %97 : vector<32x256xf32>
    %99 = math.exp %98 : vector<32x256xf32>
    %cst_41 = arith.constant 1.000000e+00 : f32
    %100 = vector.broadcast %cst_41 : f32 to vector<32x256xf32>
    %101 = arith.addf %100, %99 : vector<32x256xf32>
    %102 = arith.divf %100, %101 : vector<32x256xf32>
    %103 = arith.mulf %96, %102 : vector<32x256xf32>
    %c0_42 = arith.constant 0 : index
    %c1_43 = arith.constant 1 : index
    %c0_44 = arith.constant 0 : index
    %c0_45 = arith.constant 0 : index
    %104 = vector.load %arg8[%c0_42, %c1_43, %c0_44, %c0_45] : memref<1x3x64x32xbf16, #tpu.memory_space<vmem>>, vector<1x1x64x32xbf16>
    %105 = vector.shape_cast %104 : vector<1x1x64x32xbf16> to vector<64x32xbf16>
    %106 = arith.truncf %103 : vector<32x256xf32> to vector<32x256xbf16>
    %cst_46 = arith.constant dense<0.000000e+00> : vector<64x256xf32>
    %107 = tpu.matmul %105, %106, %cst_46 {dimension_numbers = #tpu.dot_dimension_numbers<[1], [0], [0], [1], [0, 0, 1, 1], [], []>} : vector<64x32xbf16>, vector<32x256xbf16>, vector<64x256xf32> -> vector<64x256xf32>
    %c0_47 = arith.constant 0 : index
    %c1_48 = arith.constant 1 : index
    %c0_49 = arith.constant 0 : index
    %c0_50 = arith.constant 0 : index
    %108 = vector.load %arg9[%c0_47, %c1_48, %c0_49, %c0_50] : memref<1x3x64x1xf32, #tpu.memory_space<vmem>>, vector<1x1x64x1xf32>
    %109 = vector.shape_cast %108 : vector<1x1x64x1xf32> to vector<64x1xf32>
    %110 = vector.broadcast %109 : vector<64x1xf32> to vector<64x256xf32>
    %111 = arith.addf %107, %110 : vector<64x256xf32>
    %112 = vector.extract_strided_slice %111 {offsets = [0, 0], sizes = [32, 256], strides = [1, 1]} : vector<64x256xf32> to vector<32x256xf32>
    %113 = arith.addf %75, %112 : vector<32x256xf32>
    %114 = vector.broadcast %4 : vector<1x256xf32> to vector<32x256xf32>
    %115 = arith.mulf %113, %114 : vector<32x256xf32>
    %116 = vector.extract_strided_slice %111 {offsets = [32, 0], sizes = [32, 256], strides = [1, 1]} : vector<64x256xf32> to vector<32x256xf32>
    %117 = arith.addf %77, %116 : vector<32x256xf32>
    %c2_i32_51 = arith.constant 2 : i32
    %118 = tpu.dynamic_rotate %115 by %c2_i32_51 dim 1 : vector<32x256xf32>, i32 -> vector<32x256xf32>
    %119 = arith.truncf %118 : vector<32x256xf32> to vector<32x256xbf16>
    %c1_i32_52 = arith.constant 1 : i32
    %120 = tpu.dynamic_rotate %115 by %c1_i32_52 dim 1 : vector<32x256xf32>, i32 -> vector<32x256xf32>
    %121 = arith.truncf %120 : vector<32x256xf32> to vector<32x256xbf16>
    %122 = arith.truncf %115 : vector<32x256xf32> to vector<32x256xbf16>
    %c255_i32_53 = arith.constant 255 : i32
    %123 = tpu.dynamic_rotate %115 by %c255_i32_53 dim 1 : vector<32x256xf32>, i32 -> vector<32x256xf32>
    %124 = arith.truncf %123 : vector<32x256xf32> to vector<32x256xbf16>
    %c254_i32_54 = arith.constant 254 : i32
    %125 = tpu.dynamic_rotate %115 by %c254_i32_54 dim 1 : vector<32x256xf32>, i32 -> vector<32x256xf32>
    %126 = arith.truncf %125 : vector<32x256xf32> to vector<32x256xbf16>
    %127 = tpu.concatenate %119, %121, %122, %124, %126 in 0 : vector<32x256xbf16>, vector<32x256xbf16>, vector<32x256xbf16>, vector<32x256xbf16>, vector<32x256xbf16> -> vector<160x256xbf16>
    %c0_55 = arith.constant 0 : index
    %c2 = arith.constant 2 : index
    %c0_56 = arith.constant 0 : index
    %c0_57 = arith.constant 0 : index
    %128 = vector.load %arg6[%c0_55, %c2, %c0_56, %c0_57] : memref<1x3x64x160xbf16, #tpu.memory_space<vmem>>, vector<1x1x64x160xbf16>
    %129 = vector.shape_cast %128 : vector<1x1x64x160xbf16> to vector<64x160xbf16>
    %cst_58 = arith.constant dense<0.000000e+00> : vector<64x256xf32>
    %130 = tpu.matmul %129, %127, %cst_58 {dimension_numbers = #tpu.dot_dimension_numbers<[1], [0], [0], [1], [0, 0, 1, 1], [], []>} : vector<64x160xbf16>, vector<160x256xbf16>, vector<64x256xf32> -> vector<64x256xf32>
    %c0_59 = arith.constant 0 : index
    %c2_60 = arith.constant 2 : index
    %c0_61 = arith.constant 0 : index
    %c0_62 = arith.constant 0 : index
    %131 = vector.load %arg7[%c0_59, %c2_60, %c0_61, %c0_62] : memref<1x3x64x1xf32, #tpu.memory_space<vmem>>, vector<1x1x64x1xf32>
    %132 = vector.shape_cast %131 : vector<1x1x64x1xf32> to vector<64x1xf32>
    %133 = vector.broadcast %132 : vector<64x1xf32> to vector<64x256xf32>
    %134 = arith.addf %130, %133 : vector<64x256xf32>
    %135 = vector.extract_strided_slice %134 {offsets = [0, 0], sizes = [32, 256], strides = [1, 1]} : vector<64x256xf32> to vector<32x256xf32>
    %136 = math.tanh %135 : vector<32x256xf32>
    %137 = vector.extract_strided_slice %134 {offsets = [32, 0], sizes = [32, 256], strides = [1, 1]} : vector<64x256xf32> to vector<32x256xf32>
    %138 = arith.negf %137 : vector<32x256xf32>
    %139 = math.exp %138 : vector<32x256xf32>
    %cst_63 = arith.constant 1.000000e+00 : f32
    %140 = vector.broadcast %cst_63 : f32 to vector<32x256xf32>
    %141 = arith.addf %140, %139 : vector<32x256xf32>
    %142 = arith.divf %140, %141 : vector<32x256xf32>
    %143 = arith.mulf %136, %142 : vector<32x256xf32>
    %c0_64 = arith.constant 0 : index
    %c2_65 = arith.constant 2 : index
    %c0_66 = arith.constant 0 : index
    %c0_67 = arith.constant 0 : index
    %144 = vector.load %arg8[%c0_64, %c2_65, %c0_66, %c0_67] : memref<1x3x64x32xbf16, #tpu.memory_space<vmem>>, vector<1x1x64x32xbf16>
    %145 = vector.shape_cast %144 : vector<1x1x64x32xbf16> to vector<64x32xbf16>
    %146 = arith.truncf %143 : vector<32x256xf32> to vector<32x256xbf16>
    %cst_68 = arith.constant dense<0.000000e+00> : vector<64x256xf32>
    %147 = tpu.matmul %145, %146, %cst_68 {dimension_numbers = #tpu.dot_dimension_numbers<[1], [0], [0], [1], [0, 0, 1, 1], [], []>} : vector<64x32xbf16>, vector<32x256xbf16>, vector<64x256xf32> -> vector<64x256xf32>
    %c0_69 = arith.constant 0 : index
    %c2_70 = arith.constant 2 : index
    %c0_71 = arith.constant 0 : index
    %c0_72 = arith.constant 0 : index
    %148 = vector.load %arg9[%c0_69, %c2_70, %c0_71, %c0_72] : memref<1x3x64x1xf32, #tpu.memory_space<vmem>>, vector<1x1x64x1xf32>
    %149 = vector.shape_cast %148 : vector<1x1x64x1xf32> to vector<64x1xf32>
    %150 = vector.broadcast %149 : vector<64x1xf32> to vector<64x256xf32>
    %151 = arith.addf %147, %150 : vector<64x256xf32>
    %152 = vector.extract_strided_slice %151 {offsets = [32, 0], sizes = [32, 256], strides = [1, 1]} : vector<64x256xf32> to vector<32x256xf32>
    %153 = arith.addf %117, %152 : vector<32x256xf32>
    %c0_73 = arith.constant 0 : index
    %c0_74 = arith.constant 0 : index
    %c0_75 = arith.constant 0 : index
    %154 = vector.load %arg10[%c0_73, %c0_74, %c0_75] : memref<1x4x32xbf16, #tpu.memory_space<vmem>>, vector<1x4x32xbf16>
    %155 = vector.shape_cast %154 : vector<1x4x32xbf16> to vector<4x32xbf16>
    %156 = arith.truncf %153 : vector<32x256xf32> to vector<32x256xbf16>
    %cst_76 = arith.constant dense<0.000000e+00> : vector<4x256xf32>
    %157 = tpu.matmul %155, %156, %cst_76 {dimension_numbers = #tpu.dot_dimension_numbers<[1], [0], [0], [1], [0, 0, 1, 1], [], []>} : vector<4x32xbf16>, vector<32x256xbf16>, vector<4x256xf32> -> vector<4x256xf32>
    %c0_77 = arith.constant 0 : index
    %c0_78 = arith.constant 0 : index
    %c0_79 = arith.constant 0 : index
    %158 = vector.load %arg11[%c0_77, %c0_78, %c0_79] : memref<1x4x1xf32, #tpu.memory_space<vmem>>, vector<1x4x1xf32>
    %159 = vector.shape_cast %158 : vector<1x4x1xf32> to vector<4x1xf32>
    %160 = vector.broadcast %159 : vector<4x1xf32> to vector<4x256xf32>
    %161 = arith.addf %157, %160 : vector<4x256xf32>
    %162 = vector.broadcast %4 : vector<1x256xf32> to vector<4x256xf32>
    %163 = arith.mulf %161, %162 : vector<4x256xf32>
    %c0_80 = arith.constant 0 : index
    %c0_81 = arith.constant 0 : index
    %c0_82 = arith.constant 0 : index
    %164 = vector.load %arg12[%c0_80, %c0_81, %c0_82] : memref<1x4x1xf32, #tpu.memory_space<vmem>>, vector<1x4x1xf32>
    %165 = vector.shape_cast %164 : vector<1x4x1xf32> to vector<4x1xf32>
    %cst_83 = arith.constant 1.000000e+00 : f32
    %166 = vector.broadcast %cst_83 : f32 to vector<1x256xf32>
    %167 = arith.subf %166, %4 : vector<1x256xf32>
    %168 = vector.broadcast %165 : vector<4x1xf32> to vector<4x256xf32>
    %169 = vector.broadcast %167 : vector<1x256xf32> to vector<4x256xf32>
    %170 = arith.mulf %168, %169 : vector<4x256xf32>
    %cst_84 = arith.constant 1.000000e+00 : f32
    %171 = vector.broadcast %cst_84 : f32 to vector<4x256xf32>
    %172 = arith.subf %171, %170 : vector<4x256xf32>
    %173 = arith.mulf %3, %172 : vector<4x256xf32>
    %174 = arith.addf %173, %163 : vector<4x256xf32>
    %c0_85 = arith.constant 0 : index
    %c0_86 = arith.constant 0 : index
    %175 = vector.load %arg13[%c0_85, %c0_86] : memref<4x256xf32, #tpu.memory_space<vmem>>, vector<4x256xf32>
    tpu.vector_store %arg13[%c0_85, %c0_86], %174 {strides = array<i32>} : memref<4x256xf32, #tpu.memory_space<vmem>>, vector<4x256xf32>,
    return
  }
  func.func @transform_0(%arg0: i32, %arg1: i32) -> (i32, i32) {
    %c0_i32 = arith.constant 0 : i32
    %c0_i32_0 = arith.constant 0 : i32
    return %c0_i32, %arg0 : i32, i32
  }
  func.func @transform_1(%arg0: i32, %arg1: i32) -> (i32, i32) {
    %c0_i32 = arith.constant 0 : i32
    %c0_i32_0 = arith.constant 0 : i32
    return %c0_i32, %arg0 : i32, i32
  }
  func.func @transform_2(%arg0: i32, %arg1: i32) -> (i32, i32, i32) {
    %c0_i32 = arith.constant 0 : i32
    %c0_i32_0 = arith.constant 0 : i32
    %c0_i32_1 = arith.constant 0 : i32
    return %arg1, %c0_i32, %c0_i32_0 : i32, i32, i32
  }
  func.func @transform_3(%arg0: i32, %arg1: i32) -> (i32, i32, i32) {
    %c0_i32 = arith.constant 0 : i32
    %c0_i32_0 = arith.constant 0 : i32
    %c0_i32_1 = arith.constant 0 : i32
    return %arg1, %c0_i32, %c0_i32_0 : i32, i32, i32
  }
  func.func @transform_4(%arg0: i32, %arg1: i32) -> (i32, i32, i32, i32) {
    %c0_i32 = arith.constant 0 : i32
    %c0_i32_0 = arith.constant 0 : i32
    %c0_i32_1 = arith.constant 0 : i32
    %c0_i32_2 = arith.constant 0 : i32
    return %arg1, %c0_i32, %c0_i32_0, %c0_i32_1 : i32, i32, i32, i32
  }
  func.func @transform_5(%arg0: i32, %arg1: i32) -> (i32, i32, i32, i32) {
    %c0_i32 = arith.constant 0 : i32
    %c0_i32_0 = arith.constant 0 : i32
    %c0_i32_1 = arith.constant 0 : i32
    %c0_i32_2 = arith.constant 0 : i32
    return %arg1, %c0_i32, %c0_i32_0, %c0_i32_1 : i32, i32, i32, i32
  }
  func.func @transform_6(%arg0: i32, %arg1: i32) -> (i32, i32, i32, i32) {
    %c0_i32 = arith.constant 0 : i32
    %c0_i32_0 = arith.constant 0 : i32
    %c0_i32_1 = arith.constant 0 : i32
    %c0_i32_2 = arith.constant 0 : i32
    return %arg1, %c0_i32, %c0_i32_0, %c0_i32_1 : i32, i32, i32, i32
  }
  func.func @transform_7(%arg0: i32, %arg1: i32) -> (i32, i32, i32, i32) {
    %c0_i32 = arith.constant 0 : i32
    %c0_i32_0 = arith.constant 0 : i32
    %c0_i32_1 = arith.constant 0 : i32
    %c0_i32_2 = arith.constant 0 : i32
    return %arg1, %c0_i32, %c0_i32_0, %c0_i32_1 : i32, i32, i32, i32
  }
  func.func @transform_8(%arg0: i32, %arg1: i32) -> (i32, i32, i32) {
    %c0_i32 = arith.constant 0 : i32
    %c0_i32_0 = arith.constant 0 : i32
    %c0_i32_1 = arith.constant 0 : i32
    return %arg1, %c0_i32, %c0_i32_0 : i32, i32, i32
  }
  func.func @transform_9(%arg0: i32, %arg1: i32) -> (i32, i32, i32) {
    %c0_i32 = arith.constant 0 : i32
    %c0_i32_0 = arith.constant 0 : i32
    %c0_i32_1 = arith.constant 0 : i32
    return %arg1, %c0_i32, %c0_i32_0 : i32, i32, i32
  }
  func.func @transform_10(%arg0: i32, %arg1: i32) -> (i32, i32, i32) {
    %c0_i32 = arith.constant 0 : i32
    %c0_i32_0 = arith.constant 0 : i32
    %c0_i32_1 = arith.constant 0 : i32
    return %arg1, %c0_i32, %c0_i32_0 : i32, i32, i32
  }
  func.func @transform_11(%arg0: i32, %arg1: i32) -> (i32, i32) {
    %c0_i32 = arith.constant 0 : i32
    %c0_i32_0 = arith.constant 0 : i32
    return %c0_i32, %arg0 : i32, i32
  }
}

</mosaic_0001>

<llo_original>
// kernel: _lambda_.1
$region0: #{_lambda_.1}
  #allocation0 [shape = 'u32[]', space=smem, size = 0x4, offset = 0x4, fixed_abs, tag = 'smem constant byte address 0x4 - core index']
  #allocation1 [shape = 'u32[144,128]{1,0:T(1,128)}', space=vmem, size = 0x12000, scoped, tag = 'internal scratch']
  %s0 = inlined_call_operand.vmem [shape: f32[4,512], index: 0, kind: input, shape index: {}]
  %s1 = inlined_call_operand.vmem [shape: f32[1,512], index: 1, kind: input, shape index: {}]
  %s2 = inlined_call_operand.vmem [shape: bf16[4,32,4], index: 2, kind: input, shape index: {}]
  %s3 = inlined_call_operand.vmem [shape: f32[4,32,1], index: 3, kind: input, shape index: {}]
  %s4 = inlined_call_operand.hbm [shape: bf16[4,3,64,160], index: 4, kind: input, shape index: {}]
  %s5 = inlined_call_operand.hbm [shape: f32[4,3,64,1], index: 5, kind: input, shape index: {}]
  %s6 = inlined_call_operand.hbm [shape: bf16[4,3,64,32], index: 6, kind: input, shape index: {}]
  %s7 = inlined_call_operand.hbm [shape: f32[4,3,64,1], index: 7, kind: input, shape index: {}]
  %s8 = inlined_call_operand.vmem [shape: bf16[4,4,32], index: 8, kind: input, shape index: {}]
  %s9 = inlined_call_operand.hbm [shape: f32[4,4,1], index: 9, kind: input, shape index: {}]
  %s10 = inlined_call_operand.vmem [shape: f32[4,4,1], index: 10, kind: input, shape index: {}]
  %s11 = inlined_call_operand.hbm [shape: f32[4,512], index: 11, kind: output, shape index: {}]
  %s12 = sld [smem:[#allocation0]]
  $region101: #{_lambda_.1} parent=0
    _
  %s14 = ssub.s32 1, %s12
  %s15 = scalar_select 0, %s14, %s12
  $region1: #{_lambda_.1} parent=0
    #allocation2 [shape = 'u8[196608]{0}', space=vmem, size = 0x30000, scoped, tag = 'input window, operand 4']
    #allocation3 [shape = 's32[2]{0}', space=sflag, size = 0x8, scoped, tag = 'scoped memory for _lambda_.1']
    #allocation4 [shape = 's32[2]{0}', space=sflag, size = 0x8, scoped, tag = 'scoped memory for _lambda_.1']
    #allocation5 [shape = 'u8[196608]{0}', space=vmem, size = 0x30000, scoped, tag = 'input window, operand 5']
    #allocation6 [shape = 's32[2]{0}', space=sflag, size = 0x8, scoped, tag = 'scoped memory for _lambda_.1']
    #allocation7 [shape = 'u8[98304]{0}', space=vmem, size = 0x18000, scoped, tag = 'input window, operand 6']
    #allocation8 [shape = 'u8[196608]{0}', space=vmem, size = 0x30000, scoped, tag = 'input window, operand 7']
    #allocation9 [shape = 's32[2]{0}', space=sflag, size = 0x8, scoped, tag = 'scoped memory for _lambda_.1']
    #allocation10 [shape = 'u8[4096]{0}', space=vmem, size = 0x1000, scoped, tag = 'input window, operand 9']
    #allocation11 [shape = 'u8[8192]{0}', space=vmem, size = 0x2000, scoped, tag = 'output window, operand 0']
    %16 = vsyncpa [#allocation3], 0
    %s17 = scalar_lea.sflag [#allocation3], 1
    %18 = vsyncpa %s17, 0
    %19 = vsyncpa [#allocation6], 0
    %s20 = scalar_lea.sflag [#allocation6], 1
    %21 = vsyncpa %s20, 0
    %22 = vsyncpa [#allocation9], 0
    %s23 = scalar_lea.sflag [#allocation9], 1
    %24 = vsyncpa %s23, 0
    %25 = vsyncpa [#allocation4], 0
    %s26 = scalar_lea.sflag [#allocation4], 1
    %27 = vsyncpa %s26, 0
    loop: start=0, step=1, limit=10
    $region2: #{_lambda_.1} parent=1 // loop_pre_header
      _
    $region3: #{_lambda_.1} parent=1 // loop_header
      %s29 = sphi 0, %s33
      %p30 = scmp.ge.s32.totalorder %s29, 10
      %s36 = sphi 0, %s48
      %s37 = sphi 0, %s44
      %s38 = sphi 0, %s36
      %s39 = sphi 0, %s37
      %s40 = sphi 0, %s38
      %s41 = sphi 0, %s39
      %s51 = sphi 0, %s53
      %s54 = sphi 0, %s51
      %s55 = sphi 0, %s54
      %s71 = sphi 0, %s55
      %s77 = sphi 0, %s79
      %s80 = sphi 0, %s77
      %s81 = sphi 0, %s80
      %s97 = sphi 0, %s81
      %s103 = sphi 0, %s105
      %s106 = sphi 0, %s103
      %s107 = sphi 0, %s106
      %s123 = sphi 0, %s107
      %s129 = sphi 0, %s131
      %s132 = sphi 0, %s129
      %s133 = sphi 0, %s132
      %s149 = sphi 0, %s133
      %s155 = sphi 0, %s157
      %s158 = sphi 0, %s155
      %s159 = sphi 0, %s158
      %s175 = sphi 0, %s159
      %s181 = sphi 0, %s183
      %s184 = sphi 0, %s181
      %s185 = sphi 0, %s184
      %s201 = sphi 0, %s185
      %s207 = sphi 0, %s209
      %s210 = sphi 0, %s207
      %s211 = sphi 0, %s210
      %s227 = sphi 0, %s211
      %s233 = sphi 0, %s235
      %s236 = sphi 0, %s233
      %s237 = sphi 0, %s236
      %s253 = sphi 0, %s237
      %s259 = sphi 0, %s261
      %s262 = sphi 0, %s259
      %s263 = sphi 0, %s262
      %s279 = sphi 0, %s263
      %s285 = sphi 0, %s287
      %s288 = sphi 0, %s285
      %s289 = sphi 0, %s288
      %s305 = sphi 0, %s289
      %s311 = sphi 0, %s313
      %s314 = sphi 0, %s311
      %s315 = sphi 0, %s314
      %s331 = sphi 0, %s315
      %s337 = sphi 0, %s339
      %s340 = sphi 0, %s337
      %s341 = sphi 0, %s340
      %s357 = sphi 0, %s341
    $region4: #{_lambda_.1} parent=1 // loop_header_branch
      %32 = sbr.rel (%p30) target = $region8
    $region5: #{_lambda_.1} parent=1 // loop_body
      %s34 = ssub.s32 %s29, 1
      %s35 = ssub.s32 %s29, 2
      %s42 = sadd.s32 1, %s37
      %p43 = scmp.ge.s32.totalorder %s42, 4
      %s44 = scalar_select %p43, 0, %s42
      %s45 = sadd.s32 1, %s36
      %s46 = scalar_select %p43, %s45, %s36
      %p47 = scmp.ge.s32.totalorder %s46, 2
      %s48 = scalar_select %p47, 0, %s46
      %s49 = ssub.s32 %s36, %s48
      %p50 = scmp.eq.s32.totalorder %s49, 0
      %s52 = sadd.s32 %s51, 1
      %s53 = scalar_select %p50, %s51, %s52
      %p56 = pneg %p50
      %p57 = scmp.eq.s32.totalorder %s29, 7
      %p58 = por %p56, %p57
      %p59 = scmp.ne.s32.totalorder %s51, %s54
      %p60 = scmp.eq.s32.totalorder %s29, 0
      %p61 = por %p59, %p60
      %p62 = scmp.ne.s32.totalorder %s51, %s54
      %p63 = scmp.eq.s32.totalorder %s34, 7
      %p64 = por %p62, %p63
      %p65 = scmp.ne.s32.totalorder %s54, %s55
      %p66 = scmp.eq.s32.totalorder %s34, 0
      %p67 = por %p65, %p66
      %p68 = scmp.ne.s32.totalorder %s54, %s55
      %p69 = scmp.eq.s32.totalorder %s35, 7
      %p70 = por %p68, %p69
      %p72 = scmp.ne.s32.totalorder %s55, %s71
      %p73 = scmp.eq.s32.totalorder %s35, 0
      %p74 = por %p72, %p73
      %s75 = ssub.s32 %s36, %s48
      %p76 = scmp.eq.s32.totalorder %s75, 0
      %s78 = sadd.s32 %s77, 1
      %s79 = scalar_select %p76, %s77, %s78
      %p82 = pneg %p76
      %p83 = scmp.eq.s32.totalorder %s29, 7
      %p84 = por %p82, %p83
      %p85 = scmp.ne.s32.totalorder %s77, %s80
      %p86 = scmp.eq.s32.totalorder %s29, 0
      %p87 = por %p85, %p86
      %p88 = scmp.ne.s32.totalorder %s77, %s80
      %p89 = scmp.eq.s32.totalorder %s34, 7
      %p90 = por %p88, %p89
      %p91 = scmp.ne.s32.totalorder %s80, %s81
      %p92 = scmp.eq.s32.totalorder %s34, 0
      %p93 = por %p91, %p92
      %p94 = scmp.ne.s32.totalorder %s80, %s81
      %p95 = scmp.eq.s32.totalorder %s35, 7
      %p96 = por %p94, %p95
      %p98 = scmp.ne.s32.totalorder %s81, %s97
      %p99 = scmp.eq.s32.totalorder %s35, 0
      %p100 = por %p98, %p99
      %s101 = ssub.s32 %s37, %s44
      %p102 = scmp.eq.s32.totalorder %s101, 0
      %s104 = sadd.s32 %s103, 1
      %s105 = scalar_select %p102, %s103, %s104
      %p108 = pneg %p102
      %p109 = scmp.eq.s32.totalorder %s29, 7
      %p110 = por %p108, %p109
      %p111 = scmp.ne.s32.totalorder %s103, %s106
      %p112 = scmp.eq.s32.totalorder %s29, 0
      %p113 = por %p111, %p112
      %p114 = scmp.ne.s32.totalorder %s103, %s106
      %p115 = scmp.eq.s32.totalorder %s34, 7
      %p116 = por %p114, %p115
      %p117 = scmp.ne.s32.totalorder %s106, %s107
      %p118 = scmp.eq.s32.totalorder %s34, 0
      %p119 = por %p117, %p118
      %p120 = scmp.ne.s32.totalorder %s106, %s107
      %p121 = scmp.eq.s32.totalorder %s35, 7
      %p122 = por %p120, %p121
      %p124 = scmp.ne.s32.totalorder %s107, %s123
      %p125 = scmp.eq.s32.totalorder %s35, 0
      %p126 = por %p124, %p125
      %s127 = ssub.s32 %s37, %s44
      %p128 = scmp.eq.s32.totalorder %s127, 0
      %s130 = sadd.s32 %s129, 1
      %s131 = scalar_select %p128, %s129, %s130
      %p134 = pneg %p128
      %p135 = scmp.eq.s32.totalorder %s29, 7
      %p136 = por %p134, %p135
      %p137 = scmp.ne.s32.totalorder %s129, %s132
      %p138 = scmp.eq.s32.totalorder %s29, 0
      %p139 = por %p137, %p138
      %p140 = scmp.ne.s32.totalorder %s129, %s132
      %p141 = scmp.eq.s32.totalorder %s34, 7
      %p142 = por %p140, %p141
      %p143 = scmp.ne.s32.totalorder %s132, %s133
      %p144 = scmp.eq.s32.totalorder %s34, 0
      %p145 = por %p143, %p144
      %p146 = scmp.ne.s32.totalorder %s132, %s133
      %p147 = scmp.eq.s32.totalorder %s35, 7
      %p148 = por %p146, %p147
      %p150 = scmp.ne.s32.totalorder %s133, %s149
      %p151 = scmp.eq.s32.totalorder %s35, 0
      %p152 = por %p150, %p151
      %s153 = ssub.s32 %s37, %s44
      %p154 = scmp.eq.s32.totalorder %s153, 0
      %s156 = sadd.s32 %s155, 1
      %s157 = scalar_select %p154, %s155, %s156
      %p160 = pneg %p154
      %p161 = scmp.eq.s32.totalorder %s29, 7
      %p162 = por %p160, %p161
      %p163 = scmp.ne.s32.totalorder %s155, %s158
      %p164 = scmp.eq.s32.totalorder %s29, 0
      %p165 = por %p163, %p164
      %p166 = scmp.ne.s32.totalorder %s155, %s158
      %p167 = scmp.eq.s32.totalorder %s34, 7
      %p168 = por %p166, %p167
      %p169 = scmp.ne.s32.totalorder %s158, %s159
      %p170 = scmp.eq.s32.totalorder %s34, 0
      %p171 = por %p169, %p170
      %p172 = scmp.ne.s32.totalorder %s158, %s159
      %p173 = scmp.eq.s32.totalorder %s35, 7
      %p174 = por %p172, %p173
      %p176 = scmp.ne.s32.totalorder %s159, %s175
      %p177 = scmp.eq.s32.totalorder %s35, 0
      %p178 = por %p176, %p177
      %s179 = ssub.s32 %s37, %s44
      %p180 = scmp.eq.s32.totalorder %s179, 0
      %s182 = sadd.s32 %s181, 1
      %s183 = scalar_select %p180, %s181, %s182
      %p186 = pneg %p180
      %p187 = scmp.eq.s32.totalorder %s29, 7
      %p188 = por %p186, %p187
      %p189 = scmp.ne.s32.totalorder %s181, %s184
      %p190 = scmp.eq.s32.totalorder %s29, 0
      %p191 = por %p189, %p190
      %p192 = scmp.ne.s32.totalorder %s181, %s184
      %p193 = scmp.eq.s32.totalorder %s34, 7
      %p194 = por %p192, %p193
      %p195 = scmp.ne.s32.totalorder %s184, %s185
      %p196 = scmp.eq.s32.totalorder %s34, 0
      %p197 = por %p195, %p196
      %p198 = scmp.ne.s32.totalorder %s184, %s185
      %p199 = scmp.eq.s32.totalorder %s35, 7
      %p200 = por %p198, %p199
      %p202 = scmp.ne.s32.totalorder %s185, %s201
      %p203 = scmp.eq.s32.totalorder %s35, 0
      %p204 = por %p202, %p203
      %s205 = ssub.s32 %s37, %s44
      %p206 = scmp.eq.s32.totalorder %s205, 0
      %s208 = sadd.s32 %s207, 1
      %s209 = scalar_select %p206, %s207, %s208
      %p212 = pneg %p206
      %p213 = scmp.eq.s32.totalorder %s29, 7
      %p214 = por %p212, %p213
      %p215 = scmp.ne.s32.totalorder %s207, %s210
      %p216 = scmp.eq.s32.totalorder %s29, 0
      %p217 = por %p215, %p216
      %p218 = scmp.ne.s32.totalorder %s207, %s210
      %p219 = scmp.eq.s32.totalorder %s34, 7
      %p220 = por %p218, %p219
      %p221 = scmp.ne.s32.totalorder %s210, %s211
      %p222 = scmp.eq.s32.totalorder %s34, 0
      %p223 = por %p221, %p222
      %p224 = scmp.ne.s32.totalorder %s210, %s211
      %p225 = scmp.eq.s32.totalorder %s35, 7
      %p226 = por %p224, %p225
      %p228 = scmp.ne.s32.totalorder %s211, %s227
      %p229 = scmp.eq.s32.totalorder %s35, 0
      %p230 = por %p228, %p229
      %s231 = ssub.s32 %s37, %s44
      %p232 = scmp.eq.s32.totalorder %s231, 0
      %s234 = sadd.s32 %s233, 1
      %s235 = scalar_select %p232, %s233, %s234
      %p238 = pneg %p232
      %p239 = scmp.eq.s32.totalorder %s29, 7
      %p240 = por %p238, %p239
      %p241 = scmp.ne.s32.totalorder %s233, %s236
      %p242 = scmp.eq.s32.totalorder %s29, 0
      %p243 = por %p241, %p242
      %p244 = scmp.ne.s32.totalorder %s233, %s236
      %p245 = scmp.eq.s32.totalorder %s34, 7
      %p246 = por %p244, %p245
      %p247 = scmp.ne.s32.totalorder %s236, %s237
      %p248 = scmp.eq.s32.totalorder %s34, 0
      %p249 = por %p247, %p248
      %p250 = scmp.ne.s32.totalorder %s236, %s237
      %p251 = scmp.eq.s32.totalorder %s35, 7
      %p252 = por %p250, %p251
      %p254 = scmp.ne.s32.totalorder %s237, %s253
      %p255 = scmp.eq.s32.totalorder %s35, 0
      %p256 = por %p254, %p255
      %s257 = ssub.s32 %s37, %s44
      %p258 = scmp.eq.s32.totalorder %s257, 0
      %s260 = sadd.s32 %s259, 1
      %s261 = scalar_select %p258, %s259, %s260
      %p264 = pneg %p258
      %p265 = scmp.eq.s32.totalorder %s29, 7
      %p266 = por %p264, %p265
      %p267 = scmp.ne.s32.totalorder %s259, %s262
      %p268 = scmp.eq.s32.totalorder %s29, 0
      %p269 = por %p267, %p268
      %p270 = scmp.ne.s32.totalorder %s259, %s262
      %p271 = scmp.eq.s32.totalorder %s34, 7
      %p272 = por %p270, %p271
      %p273 = scmp.ne.s32.totalorder %s262, %s263
      %p274 = scmp.eq.s32.totalorder %s34, 0
      %p275 = por %p273, %p274
      %p276 = scmp.ne.s32.totalorder %s262, %s263
      %p277 = scmp.eq.s32.totalorder %s35, 7
      %p278 = por %p276, %p277
      %p280 = scmp.ne.s32.totalorder %s263, %s279
      %p281 = scmp.eq.s32.totalorder %s35, 0
      %p282 = por %p280, %p281
      %s283 = ssub.s32 %s37, %s44
      %p284 = scmp.eq.s32.totalorder %s283, 0
      %s286 = sadd.s32 %s285, 1
      %s287 = scalar_select %p284, %s285, %s286
      %p290 = pneg %p284
      %p291 = scmp.eq.s32.totalorder %s29, 7
      %p292 = por %p290, %p291
      %p293 = scmp.ne.s32.totalorder %s285, %s288
      %p294 = scmp.eq.s32.totalorder %s29, 0
      %p295 = por %p293, %p294
      %p296 = scmp.ne.s32.totalorder %s285, %s288
      %p297 = scmp.eq.s32.totalorder %s34, 7
      %p298 = por %p296, %p297
      %p299 = scmp.ne.s32.totalorder %s288, %s289
      %p300 = scmp.eq.s32.totalorder %s34, 0
      %p301 = por %p299, %p300
      %p302 = scmp.ne.s32.totalorder %s288, %s289
      %p303 = scmp.eq.s32.totalorder %s35, 7
      %p304 = por %p302, %p303
      %p306 = scmp.ne.s32.totalorder %s289, %s305
      %p307 = scmp.eq.s32.totalorder %s35, 0
      %p308 = por %p306, %p307
      %s309 = ssub.s32 %s37, %s44
      %p310 = scmp.eq.s32.totalorder %s309, 0
      %s312 = sadd.s32 %s311, 1
      %s313 = scalar_select %p310, %s311, %s312
      %p316 = pneg %p310
      %p317 = scmp.eq.s32.totalorder %s29, 7
      %p318 = por %p316, %p317
      %p319 = scmp.ne.s32.totalorder %s311, %s314
      %p320 = scmp.eq.s32.totalorder %s29, 0
      %p321 = por %p319, %p320
      %p322 = scmp.ne.s32.totalorder %s311, %s314
      %p323 = scmp.eq.s32.totalorder %s34, 7
      %p324 = por %p322, %p323
      %p325 = scmp.ne.s32.totalorder %s314, %s315
      %p326 = scmp.eq.s32.totalorder %s34, 0
      %p327 = por %p325, %p326
      %p328 = scmp.ne.s32.totalorder %s314, %s315
      %p329 = scmp.eq.s32.totalorder %s35, 7
      %p330 = por %p328, %p329
      %p332 = scmp.ne.s32.totalorder %s315, %s331
      %p333 = scmp.eq.s32.totalorder %s35, 0
      %p334 = por %p332, %p333
      %s335 = ssub.s32 %s36, %s48
      %p336 = scmp.eq.s32.totalorder %s335, 0
      %s338 = sadd.s32 %s337, 1
      %s339 = scalar_select %p336, %s337, %s338
      %p342 = pneg %p336
      %p343 = scmp.eq.s32.totalorder %s29, 7
      %p344 = por %p342, %p343
      %p345 = scmp.ne.s32.totalorder %s337, %s340
      %p346 = scmp.eq.s32.totalorder %s29, 0
      %p347 = por %p345, %p346
      %p348 = scmp.ne.s32.totalorder %s337, %s340
      %p349 = scmp.eq.s32.totalorder %s34, 7
      %p350 = por %p348, %p349
      %p351 = scmp.ne.s32.totalorder %s340, %s341
      %p352 = scmp.eq.s32.totalorder %s34, 0
      %p353 = por %p351, %p352
      %p354 = scmp.ne.s32.totalorder %s340, %s341
      %p355 = scmp.eq.s32.totalorder %s35, 7
      %p356 = por %p354, %p355
      %p358 = scmp.ne.s32.totalorder %s341, %s357
      %p359 = scmp.eq.s32.totalorder %s35, 0
      %p360 = por %p358, %p359
      %p361 = scmp.le.s32.totalorder 1, %s29
      %p362 = scmp.lt.s32.totalorder %s29, 9
      %p363 = pnand %p361, %p362
      %p364 = pneg %p363
      // Predicated region
      $region9: #{_lambda_.1} parent=5 // pred_check
        _
      $region10: #{_lambda_.1} parent=5 // pred_check_branch
        %366 = sbr.rel (%p363) target = $region12
      $region11: #{_lambda_.1} parent=5 // pred_region
        %s367 = ssub.s32 %s29, 1
      $region12: #{_lambda_.1} parent=5 // pred_fallthru
        _
      %p368 = scmp.lt.s32.totalorder %s29, 8
      // Predicated region
      $region13: #{_lambda_.1} parent=5 // pred_check
        %p369 = pneg %p368
      $region14: #{_lambda_.1} parent=5 // pred_check_branch
        %371 = sbr.rel (%p369) target = $region16
      $region15: #{_lambda_.1} parent=5 // pred_region
        // Predicated region
        $region17: #{_lambda_.1} parent=15 // pred_check
          %p372 = pneg %p61
        $region18: #{_lambda_.1} parent=15 // pred_check_branch
          %374 = sbr.rel (%p372) target = $region20
        $region19: #{_lambda_.1} parent=15 // pred_region
          %s375 = smul.u32 2, %s36
          %p376 = scmp.lt.s32.totalorder %s375, 3
          %s377 = scalar_select %p376, %s375, 3
          %s378 = smul.addr %s377, 4
          %s379 = scalar_lea.vmem %s0, %s378
          %s380 = smul.u32 2, %s36
        $region20: #{_lambda_.1} parent=15 // pred_fallthru
          _
        // Predicated region
        $region21: #{_lambda_.1} parent=15 // pred_check
          %p381 = pneg %p87
        $region22: #{_lambda_.1} parent=15 // pred_check_branch
          %383 = sbr.rel (%p381) target = $region24
        $region23: #{_lambda_.1} parent=15 // pred_region
          %s384 = smul.u32 2, %s36
          %p385 = scmp.lt.s32.totalorder %s384, 3
          %s386 = scalar_select %p385, %s384, 3
          %s387 = scalar_lea.vmem %s1, %s386
          %s388 = smul.u32 2, %s36
        $region24: #{_lambda_.1} parent=15 // pred_fallthru
          _
        // Predicated region
        $region25: #{_lambda_.1} parent=15 // pred_check
          %p389 = pneg %p113
        $region26: #{_lambda_.1} parent=15 // pred_check_branch
          %391 = sbr.rel (%p389) target = $region28
        $region27: #{_lambda_.1} parent=15 // pred_region
          %p392 = scmp.lt.s32.totalorder %s37, 3
          %s393 = scalar_select %p392, %s37, 3
          %s394 = smul.addr %s393, 4
          %s395 = smul.addr %s394, 4
          %s396 = scalar_lea.vmem %s2, %s395
        $region28: #{_lambda_.1} parent=15 // pred_fallthru
          _
        // Predicated region
        $region29: #{_lambda_.1} parent=15 // pred_check
          %p397 = pneg %p139
        $region30: #{_lambda_.1} parent=15 // pred_check_branch
          %399 = sbr.rel (%p397) target = $region32
        $region31: #{_lambda_.1} parent=15 // pred_region
          %p400 = scmp.lt.s32.totalorder %s37, 3
          %s401 = scalar_select %p400, %s37, 3
          %s402 = smul.addr %s401, 4
          %s403 = smul.addr %s402, 8
          %s404 = scalar_lea.vmem %s3, %s403
        $region32: #{_lambda_.1} parent=15 // pred_fallthru
          _
        // Predicated region
        $region33: #{_lambda_.1} parent=15 // pred_check
          %p405 = pneg %p165
        $region34: #{_lambda_.1} parent=15 // pred_check_branch
          %407 = sbr.rel (%p405) target = $region36
        $region35: #{_lambda_.1} parent=15 // pred_region
          %s408 = sand.u32 %s155, 1
          %s409 = scalar_lea.sflag [#allocation3], %s408
          %s410 = sand.u32 %s155, 1
          %s411 = smul.addr %s410, 192
          %s412 = scalar_lea.vmem [#allocation2], %s411
          %s414 = ssub.s32 3072, 3072
          %415 = vsyncadd %s409, %s414
          %s416 = smul.addr %s37, 48
          %s417 = smul.addr %s416, 64
          %s418 = scalar_lea.hbm %s4, %s417
          %s419 = sshll.u32 %s412, 4
          %s420 = int_to_ptr.vmem [resolvable:$true] %s419
          %425 = dma.hbm_to_vmem [thread:$0]  %s418, 3072, %s420, %s409, 128, 128, 8
        $region36: #{_lambda_.1} parent=15 // pred_fallthru
          _
        // Predicated region
        $region37: #{_lambda_.1} parent=15 // pred_check
          %p426 = pneg %p191
        $region38: #{_lambda_.1} parent=15 // pred_check_branch
          %428 = sbr.rel (%p426) target = $region40
        $region39: #{_lambda_.1} parent=15 // pred_region
          %s429 = sand.u32 %s29, 1
          %s430 = scalar_lea.sflag [#allocation6], %s429
          %s431 = sand.u32 %s181, 1
          %s432 = smul.addr %s431, 192
          %s433 = scalar_lea.vmem [#allocation5], %s432
          %s435 = ssub.s32 3072, 3072
          %436 = vsyncadd %s430, %s435
          %s437 = smul.addr %s37, 24
          %s438 = smul.addr %s437, 128
          %s439 = scalar_lea.hbm %s5, %s438
          %s440 = sshll.u32 %s433, 4
          %s441 = int_to_ptr.vmem [resolvable:$true] %s440
          %446 = dma.hbm_to_vmem [thread:$0]  %s439, 3072, %s441, %s430, 128, 128, 8
        $region40: #{_lambda_.1} parent=15 // pred_fallthru
          _
        // Predicated region
        $region41: #{_lambda_.1} parent=15 // pred_check
          %p447 = pneg %p217
        $region42: #{_lambda_.1} parent=15 // pred_check_branch
          %449 = sbr.rel (%p447) target = $region44
        $region43: #{_lambda_.1} parent=15 // pred_region
          %s450 = sand.u32 %s29, 1
          %s451 = scalar_lea.sflag [#allocation6], %s450
          %s452 = sand.u32 %s207, 1
          %s453 = smul.addr %s452, 96
          %s454 = scalar_lea.vmem [#allocation7], %s453
          %s456 = ssub.s32 1536, 1536
          %457 = vsyncadd %s451, %s456
          %s458 = smul.addr %s37, 24
          %s459 = smul.addr %s458, 64
          %s460 = scalar_lea.hbm %s6, %s459
          %s461 = sshll.u32 %s454, 4
          %s462 = int_to_ptr.vmem [resolvable:$true] %s461
          %467 = dma.hbm_to_vmem [thread:$0]  %s460, 1536, %s462, %s451, 64, 64, 4
        $region44: #{_lambda_.1} parent=15 // pred_fallthru
          _
        // Predicated region
        $region45: #{_lambda_.1} parent=15 // pred_check
          %p468 = pneg %p243
        $region46: #{_lambda_.1} parent=15 // pred_check_branch
          %470 = sbr.rel (%p468) target = $region48
        $region47: #{_lambda_.1} parent=15 // pred_region
          %s471 = sand.u32 %s29, 1
          %s472 = scalar_lea.sflag [#allocation9], %s471
          %s473 = sand.u32 %s233, 1
          %s474 = smul.addr %s473, 192
          %s475 = scalar_lea.vmem [#allocation8], %s474
          %s477 = ssub.s32 3072, 3072
          %478 = vsyncadd %s472, %s477
          %s479 = smul.addr %s37, 24
          %s480 = smul.addr %s479, 128
          %s481 = scalar_lea.hbm %s7, %s480
          %s482 = sshll.u32 %s475, 4
          %s483 = int_to_ptr.vmem [resolvable:$true] %s482
          %488 = dma.hbm_to_vmem [thread:$0]  %s481, 3072, %s483, %s472, 128, 128, 8
        $region48: #{_lambda_.1} parent=15 // pred_fallthru
          _
        // Predicated region
        $region49: #{_lambda_.1} parent=15 // pred_check
          %p489 = pneg %p269
        $region50: #{_lambda_.1} parent=15 // pred_check_branch
          %491 = sbr.rel (%p489) target = $region52
        $region51: #{_lambda_.1} parent=15 // pred_region
          %p492 = scmp.lt.s32.totalorder %s37, 3
          %s493 = scalar_select %p492, %s37, 3
          %s494 = smul.addr %s493, 2
          %s495 = scalar_lea.vmem %s8, %s494
        $region52: #{_lambda_.1} parent=15 // pred_fallthru
          _
        // Predicated region
        $region53: #{_lambda_.1} parent=15 // pred_check
          %p496 = pneg %p295
        $region54: #{_lambda_.1} parent=15 // pred_check_branch
          %498 = sbr.rel (%p496) target = $region56
        $region55: #{_lambda_.1} parent=15 // pred_region
          %s499 = sand.u32 %s29, 1
          %s500 = scalar_lea.sflag [#allocation9], %s499
          %s501 = sand.u32 %s285, 1
          %s502 = smul.addr %s501, 4
          %s503 = scalar_lea.vmem [#allocation10], %s502
          %s505 = ssub.s32 64, 64
          %506 = vsyncadd %s500, %s505
          %s507 = smul.addr %s37, 64
          %s508 = scalar_lea.hbm %s9, %s507
          %s510 = sshll.u32 %s503, 4
          %s511 = int_to_ptr.vmem [resolvable:$true] %s510
          %513 = dma.hbm_to_vmem [thread:$0]  %s508, 64, %s511, %s500
        $region56: #{_lambda_.1} parent=15 // pred_fallthru
          _
        // Predicated region
        $region57: #{_lambda_.1} parent=15 // pred_check
          %p514 = pneg %p321
        $region58: #{_lambda_.1} parent=15 // pred_check_branch
          %516 = sbr.rel (%p514) target = $region60
        $region59: #{_lambda_.1} parent=15 // pred_region
          %p517 = scmp.lt.s32.totalorder %s37, 3
          %s518 = scalar_select %p517, %s37, 3
          %s519 = smul.addr %s518, 4
          %s520 = scalar_lea.vmem %s10, %s519
        $region60: #{_lambda_.1} parent=15 // pred_fallthru
          _
      $region16: #{_lambda_.1} parent=5 // pred_fallthru
        _
      %p521 = scmp.le.s32.totalorder 1, %s29
      %p522 = scmp.lt.s32.totalorder %s29, 9
      %p523 = pnand %p521, %p522
      %p524 = pneg %p523
      // Predicated region
      $region61: #{_lambda_.1} parent=5 // pred_check
        _
      $region62: #{_lambda_.1} parent=5 // pred_check_branch
        %526 = sbr.rel (%p523) target = $region64
      $region63: #{_lambda_.1} parent=5 // pred_region
        %s527 = ssub.s32 %s29, 1
        %s528 = sand.u32 %s158, 1
        %s529 = scalar_lea.sflag [#allocation3], %s528
        %s530 = sand.u32 %s158, 1
        %s531 = smul.addr %s530, 192
        %s532 = scalar_lea.vmem [#allocation2], %s531
        // Predicated region
        $region65: #{_lambda_.1} parent=63 // pred_check
          %p533 = pneg %p171
        $region66: #{_lambda_.1} parent=63 // pred_check_branch
          %535 = sbr.rel (%p533) target = $region68
        $region67: #{_lambda_.1} parent=63 // pred_region
          %536 = dma.done %s529, 3072
        $region68: #{_lambda_.1} parent=63 // pred_fallthru
          _
        %s537 = sand.u32 %s34, 1
        %s538 = scalar_lea.sflag [#allocation6], %s537
        %s539 = sand.u32 %s184, 1
        %s540 = smul.addr %s539, 192
        %s541 = scalar_lea.vmem [#allocation5], %s540
        // Predicated region
        $region69: #{_lambda_.1} parent=63 // pred_check
          %p542 = pneg %p197
        $region70: #{_lambda_.1} parent=63 // pred_check_branch
          %544 = sbr.rel (%p542) target = $region72
        $region71: #{_lambda_.1} parent=63 // pred_region
          %545 = dma.done %s538, 3072
        $region72: #{_lambda_.1} parent=63 // pred_fallthru
          _
        %s546 = sand.u32 %s34, 1
        %s547 = scalar_lea.sflag [#allocation6], %s546
        %s548 = sand.u32 %s210, 1
        %s549 = smul.addr %s548, 96
        %s550 = scalar_lea.vmem [#allocation7], %s549
        // Predicated region
        $region73: #{_lambda_.1} parent=63 // pred_check
          %p551 = pneg %p223
        $region74: #{_lambda_.1} parent=63 // pred_check_branch
          %553 = sbr.rel (%p551) target = $region76
        $region75: #{_lambda_.1} parent=63 // pred_region
          %554 = dma.done %s547, 1536
        $region76: #{_lambda_.1} parent=63 // pred_fallthru
          _
        %s555 = sand.u32 %s34, 1
        %s556 = scalar_lea.sflag [#allocation9], %s555
        %s557 = sand.u32 %s236, 1
        %s558 = smul.addr %s557, 192
        %s559 = scalar_lea.vmem [#allocation8], %s558
        // Predicated region
        $region77: #{_lambda_.1} parent=63 // pred_check
          %p560 = pneg %p249
        $region78: #{_lambda_.1} parent=63 // pred_check_branch
          %562 = sbr.rel (%p560) target = $region80
        $region79: #{_lambda_.1} parent=63 // pred_region
          %563 = dma.done %s556, 3072
        $region80: #{_lambda_.1} parent=63 // pred_fallthru
          _
        %s564 = sand.u32 %s34, 1
        %s565 = scalar_lea.sflag [#allocation9], %s564
        %s566 = sand.u32 %s288, 1
        %s567 = smul.addr %s566, 4
        %s568 = scalar_lea.vmem [#allocation10], %s567
        // Predicated region
        $region81: #{_lambda_.1} parent=63 // pred_check
          %p569 = pneg %p301
        $region82: #{_lambda_.1} parent=63 // pred_check_branch
          %571 = sbr.rel (%p569) target = $region84
        $region83: #{_lambda_.1} parent=63 // pred_region
          %572 = dma.done %s565, 64
        $region84: #{_lambda_.1} parent=63 // pred_fallthru
          _
        %s573 = smul.u32 2, %s38
        %p574 = scmp.lt.s32.totalorder %s573, 3
        %s575 = scalar_select %p574, %s573, 3
        %s576 = smul.addr %s575, 4
        %s577 = scalar_lea.vmem %s0, %s576
        %p578 = pneg %p67
        %p579 = pneg %p64
        %s580 = smul.u32 2, %s38
        %p581 = scmp.lt.s32.totalorder %s580, 3
        %s582 = scalar_select %p581, %s580, 3
        %s583 = scalar_lea.vmem %s1, %s582
        %p584 = pneg %p93
        %p585 = pneg %p90
        %p586 = scmp.lt.s32.totalorder %s39, 3
        %s587 = scalar_select %p586, %s39, 3
        %s588 = smul.addr %s587, 4
        %s589 = smul.addr %s588, 4
        %s590 = scalar_lea.vmem %s2, %s589
        %p591 = pneg %p119
        %p592 = pneg %p116
        %p593 = scmp.lt.s32.totalorder %s39, 3
        %s594 = scalar_select %p593, %s39, 3
        %s595 = smul.addr %s594, 4
        %s596 = smul.addr %s595, 8
        %s597 = scalar_lea.vmem %s3, %s596
        %p598 = pneg %p145
        %p599 = pneg %p142
        %s600 = sand.u32 %s158, 1
        %s601 = scalar_lea.sflag [#allocation3], %s600
        %s602 = sand.u32 %s158, 1
        %s603 = smul.addr %s602, 192
        %s604 = scalar_lea.vmem [#allocation2], %s603
        %p605 = pneg %p171
        %p606 = pneg %p168
        %s607 = sand.u32 %s34, 1
        %s608 = scalar_lea.sflag [#allocation6], %s607
        %s609 = sand.u32 %s184, 1
        %s610 = smul.addr %s609, 192
        %s611 = scalar_lea.vmem [#allocation5], %s610
        %p612 = pneg %p197
        %p613 = pneg %p194
        %s614 = sand.u32 %s34, 1
        %s615 = scalar_lea.sflag [#allocation6], %s614
        %s616 = sand.u32 %s210, 1
        %s617 = smul.addr %s616, 96
        %s618 = scalar_lea.vmem [#allocation7], %s617
        %p619 = pneg %p223
        %p620 = pneg %p220
        %s621 = sand.u32 %s34, 1
        %s622 = scalar_lea.sflag [#allocation9], %s621
        %s623 = sand.u32 %s236, 1
        %s624 = smul.addr %s623, 192
        %s625 = scalar_lea.vmem [#allocation8], %s624
        %p626 = pneg %p249
        %p627 = pneg %p246
        %p628 = scmp.lt.s32.totalorder %s39, 3
        %s629 = scalar_select %p628, %s39, 3
        %s630 = smul.addr %s629, 2
        %s631 = scalar_lea.vmem %s8, %s630
        %p632 = pneg %p275
        %p633 = pneg %p272
        %s634 = sand.u32 %s34, 1
        %s635 = scalar_lea.sflag [#allocation9], %s634
        %s636 = sand.u32 %s288, 1
        %s637 = smul.addr %s636, 4
        %s638 = scalar_lea.vmem [#allocation10], %s637
        %p639 = pneg %p301
        %p640 = pneg %p298
        %p641 = scmp.lt.s32.totalorder %s39, 3
        %s642 = scalar_select %p641, %s39, 3
        %s643 = smul.addr %s642, 4
        %s644 = scalar_lea.vmem %s10, %s643
        %p645 = pneg %p327
        %p646 = pneg %p324
        %p647 = pneg %p353
        %p648 = pneg %p350
        %s649 = sand.u32 %s340, 1
        %s650 = scalar_lea.sflag [#allocation4], %s649
        %s651 = sand.u32 %s340, 1
        %s652 = smul.addr %s651, 8
        %s653 = scalar_lea.vmem [#allocation11], %s652
        %s654 = smul.u32 2, %s38
        %p655 = scmp.lt.s32.totalorder %s654, 3
        %s656 = scalar_select %p655, %s654, 3
        %s657 = smul.addr %s656, 4
        %s658 = scalar_lea.vmem %s0, %s657
        %s659 = smul.u32 2, %s38
        %s660 = smul.u32 2, %s38
        %p661 = scmp.lt.s32.totalorder %s660, 3
        %s662 = scalar_select %p661, %s660, 3
        %s663 = scalar_lea.vmem %s1, %s662
        %s664 = smul.u32 2, %s38
        %p665 = scmp.lt.s32.totalorder %s39, 3
        %s666 = scalar_select %p665, %s39, 3
        %s667 = smul.addr %s666, 4
        %s668 = smul.addr %s667, 4
        %s669 = scalar_lea.vmem %s2, %s668
        %p670 = scmp.lt.s32.totalorder %s39, 3
        %s671 = scalar_select %p670, %s39, 3
        %s672 = smul.addr %s671, 4
        %s673 = smul.addr %s672, 8
        %s674 = scalar_lea.vmem %s3, %s673
        %p675 = scmp.lt.s32.totalorder %s39, 3
        %s676 = scalar_select %p675, %s39, 3
        %s677 = smul.addr %s676, 2
        %s678 = scalar_lea.vmem %s8, %s677
        %p679 = scmp.lt.s32.totalorder %s39, 3
        %s680 = scalar_select %p679, %s39, 3
        %s681 = smul.addr %s680, 4
        %s682 = scalar_lea.vmem %s10, %s681
        %s683 = smul.u32 2, %s38
        %p685 = scmp.eq.s32.totalorder %s39, 0
        // Predicated region
        $region85: #{_lambda_.1} parent=63 // pred_check
          %p686 = pneg %p685
        $region86: #{_lambda_.1} parent=63 // pred_check_branch
          %688 = sbr.rel (%p686) target = $region88
        $region87: #{_lambda_.1} parent=63 // pred_region
          %v689 = vld [vmem:[%s658] sm:$0xff]
          %690 = vst [vmem:[%s653] sm:$0xff] %v689
        $region88: #{_lambda_.1} parent=63 // pred_fallthru
          _
        %v691 = vld [vmem:[%s653] sm:$0xff]
        %v692 = vld [vmem:[%s663] sm:$0x3]
        %v693 = vld [vmem:[%s669] sm:$0xf]
        %v694 = vld [vmem:[%s669 + $0x4] sm:$0xf]
        %v695 = vld [vmem:[%s669 + $0x8] sm:$0xf]
        %v696 = vld [vmem:[%s669 + $0xc] sm:$0xf]
        %v697 = vunpack.c.l.bf16 %v693
        %v698 = vunpack.c.l.bf16 %v694
        %v699 = vunpack.c.l.bf16 %v695
        %v700 = vunpack.c.l.bf16 %v696
        %702 = vset.pattern.permute.xlu0 0
        %703 = vperm.xlu0 %702, %v697
        %v704 = vpop.permute.xlu0 %703
        %707 = vset.pattern.permute.xlu0 0
        %708 = vperm.xlu0 %707, %v698
        %v709 = vpop.permute.xlu0 %708
        %712 = vset.pattern.permute.xlu0 0
        %713 = vperm.xlu0 %712, %v699
        %v714 = vpop.permute.xlu0 %713
        %717 = vset.pattern.permute.xlu0 0
        %718 = vperm.xlu0 %717, %v700
        %v719 = vpop.permute.xlu0 %718
        %v722 = vlaneseq
        %v723 = vshrl.u32 %v722, 7
        %v724 = vsub.s32 0, %v723
        %v725 = vrot.slane %v691, %v724
        %v726 = vlaneseq
        %v727 = vshrl.u32 %v726, 7
        %v728 = vsub.s32 4, %v727
        %v729 = vrot.slane %v691, %v728
        %v732 = vlaneseq
        %v733 = vshrl.u32 %v732, 7
        %v734 = vsub.s32 0, %v733
        %v735 = vrot.slane %v725, %v734
        %v736 = vlaneseq
        %v737 = vshrl.u32 %v736, 7
        %v738 = vsub.s32 0, %v737
        %v739 = vrot.slane %v729, %v738
        %v740 = vmul.f32 %v704, %v735
        %v741 = vmul.f32 %v704, %v739
        %v742 = vmul.f32 %v709, %v735
        %v743 = vmul.f32 %v709, %v739
        %v744 = vmul.f32 %v714, %v735
        %v745 = vmul.f32 %v714, %v739
        %v746 = vmul.f32 %v719, %v735
        %v747 = vmul.f32 %v719, %v739
        %748 = vset.pattern.permute.xlu0 1
        %749 = vperm.xlu0 %748, %v697
        %v750 = vpop.permute.xlu0 %749
        %752 = vset.pattern.permute.xlu0 1
        %753 = vperm.xlu0 %752, %v698
        %v754 = vpop.permute.xlu0 %753
        %756 = vset.pattern.permute.xlu0 1
        %757 = vperm.xlu0 %756, %v699
        %v758 = vpop.permute.xlu0 %757
        %760 = vset.pattern.permute.xlu0 1
        %761 = vperm.xlu0 %760, %v700
        %v762 = vpop.permute.xlu0 %761
        %v764 = vlaneseq
        %v765 = vshrl.u32 %v764, 7
        %v766 = vsub.s32 1, %v765
        %v767 = vrot.slane %v691, %v766
        %v768 = vlaneseq
        %v769 = vshrl.u32 %v768, 7
        %v770 = vsub.s32 5, %v769
        %v771 = vrot.slane %v691, %v770
        %v774 = vlaneseq
        %v775 = vshrl.u32 %v774, 7
        %v776 = vsub.s32 1, %v775
        %v777 = vrot.slane %v767, %v776
        %v778 = vlaneseq
        %v779 = vshrl.u32 %v778, 7
        %v780 = vsub.s32 1, %v779
        %v781 = vrot.slane %v771, %v780
        %v782 = vmul.f32 %v750, %v777
        %v783 = vmul.f32 %v750, %v781
        %v784 = vmul.f32 %v754, %v777
        %v785 = vmul.f32 %v754, %v781
        %v786 = vmul.f32 %v758, %v777
        %v787 = vmul.f32 %v758, %v781
        %v788 = vmul.f32 %v762, %v777
        %v789 = vmul.f32 %v762, %v781
        %v790 = vadd.f32 %v740, %v782
        %v791 = vadd.f32 %v741, %v783
        %v792 = vadd.f32 %v742, %v784
        %v793 = vadd.f32 %v743, %v785
        %v794 = vadd.f32 %v744, %v786
        %v795 = vadd.f32 %v745, %v787
        %v796 = vadd.f32 %v746, %v788
        %v797 = vadd.f32 %v747, %v789
        %798 = vset.pattern.permute.xlu0 2
        %799 = vperm.xlu0 %798, %v697
        %v800 = vpop.permute.xlu0 %799
        %802 = vset.pattern.permute.xlu0 2
        %803 = vperm.xlu0 %802, %v698
        %v804 = vpop.permute.xlu0 %803
        %806 = vset.pattern.permute.xlu0 2
        %807 = vperm.xlu0 %806, %v699
        %v808 = vpop.permute.xlu0 %807
        %810 = vset.pattern.permute.xlu0 2
        %811 = vperm.xlu0 %810, %v700
        %v812 = vpop.permute.xlu0 %811
        %v814 = vlaneseq
        %v815 = vshrl.u32 %v814, 7
        %v816 = vsub.s32 2, %v815
        %v817 = vrot.slane %v691, %v816
        %v818 = vlaneseq
        %v819 = vshrl.u32 %v818, 7
        %v820 = vsub.s32 6, %v819
        %v821 = vrot.slane %v691, %v820
        %v824 = vlaneseq
        %v825 = vshrl.u32 %v824, 7
        %v826 = vsub.s32 2, %v825
        %v827 = vrot.slane %v817, %v826
        %v828 = vlaneseq
        %v829 = vshrl.u32 %v828, 7
        %v830 = vsub.s32 2, %v829
        %v831 = vrot.slane %v821, %v830
        %v832 = vmul.f32 %v800, %v827
        %v833 = vmul.f32 %v800, %v831
        %v834 = vmul.f32 %v804, %v827
        %v835 = vmul.f32 %v804, %v831
        %v836 = vmul.f32 %v808, %v827
        %v837 = vmul.f32 %v808, %v831
        %v838 = vmul.f32 %v812, %v827
        %v839 = vmul.f32 %v812, %v831
        %v840 = vadd.f32 %v790, %v832
        %v841 = vadd.f32 %v791, %v833
        %v842 = vadd.f32 %v792, %v834
        %v843 = vadd.f32 %v793, %v835
        %v844 = vadd.f32 %v794, %v836
        %v845 = vadd.f32 %v795, %v837
        %v846 = vadd.f32 %v796, %v838
        %v847 = vadd.f32 %v797, %v839
        %848 = vset.pattern.permute.xlu0 3
        %849 = vperm.xlu0 %848, %v697
        %v850 = vpop.permute.xlu0 %849
        %852 = vset.pattern.permute.xlu0 3
        %853 = vperm.xlu0 %852, %v698
        %v854 = vpop.permute.xlu0 %853
        %856 = vset.pattern.permute.xlu0 3
        %857 = vperm.xlu0 %856, %v699
        %v858 = vpop.permute.xlu0 %857
        %860 = vset.pattern.permute.xlu0 3
        %861 = vperm.xlu0 %860, %v700
        %v862 = vpop.permute.xlu0 %861
        %v864 = vlaneseq
        %v865 = vshrl.u32 %v864, 7
        %v866 = vsub.s32 3, %v865
        %v867 = vrot.slane %v691, %v866
        %v868 = vlaneseq
        %v869 = vshrl.u32 %v868, 7
        %v870 = vsub.s32 7, %v869
        %v871 = vrot.slane %v691, %v870
        %v874 = vlaneseq
        %v875 = vshrl.u32 %v874, 7
        %v876 = vsub.s32 3, %v875
        %v877 = vrot.slane %v867, %v876
        %v878 = vlaneseq
        %v879 = vshrl.u32 %v878, 7
        %v880 = vsub.s32 3, %v879
        %v881 = vrot.slane %v871, %v880
        %v882 = vmul.f32 %v850, %v877
        %v883 = vmul.f32 %v850, %v881
        %v884 = vmul.f32 %v854, %v877
        %v885 = vmul.f32 %v854, %v881
        %v886 = vmul.f32 %v858, %v877
        %v887 = vmul.f32 %v858, %v881
        %v888 = vmul.f32 %v862, %v877
        %v889 = vmul.f32 %v862, %v881
        %v890 = vadd.f32 %v840, %v882
        %v891 = vadd.f32 %v841, %v883
        %v892 = vadd.f32 %v842, %v884
        %v893 = vadd.f32 %v843, %v885
        %v894 = vadd.f32 %v844, %v886
        %v895 = vadd.f32 %v845, %v887
        %v896 = vadd.f32 %v846, %v888
        %v897 = vadd.f32 %v847, %v889
        %v898 = vld [vmem:[%s674] sm:$0xff]
        %v899 = vld [vmem:[%s674 + $0x8] sm:$0xff]
        %v900 = vld [vmem:[%s674 + $0x10] sm:$0xff]
        %v901 = vld [vmem:[%s674 + $0x18] sm:$0xff]
        %903 = vset.pattern.permute.xlu0 0
        %904 = vperm.xlu0 %903, %v898
        %v905 = vpop.permute.xlu0 %904
        %908 = vset.pattern.permute.xlu0 0
        %909 = vperm.xlu0 %908, %v899
        %v910 = vpop.permute.xlu0 %909
        %913 = vset.pattern.permute.xlu0 0
        %914 = vperm.xlu0 %913, %v900
        %v915 = vpop.permute.xlu0 %914
        %918 = vset.pattern.permute.xlu0 0
        %919 = vperm.xlu0 %918, %v901
        %v920 = vpop.permute.xlu0 %919
        %v922 = vadd.f32 %v890, %v905
        %v923 = vadd.f32 %v891, %v905
        %v924 = vadd.f32 %v892, %v910
        %v925 = vadd.f32 %v893, %v910
        %v926 = vadd.f32 %v894, %v915
        %v927 = vadd.f32 %v895, %v915
        %v928 = vadd.f32 %v896, %v920
        %v929 = vadd.f32 %v897, %v920
        %v931 = vlaneseq
        %v932 = vshrl.u32 %v931, 7
        %v933 = vsub.s32 0, %v932
        %v934 = vrot.slane %v692, %v933
        %v935 = vlaneseq
        %v936 = vshrl.u32 %v935, 7
        %v937 = vsub.s32 1, %v936
        %v938 = vrot.slane %v692, %v937
        %v941 = vmul.f32 %v922, %v934
        %v942 = vmul.f32 %v923, %v938
        %v943 = vmul.f32 %v924, %v934
        %v944 = vmul.f32 %v925, %v938
        %v945 = vmul.f32 %v926, %v934
        %v946 = vmul.f32 %v927, %v938
        %v947 = vmul.f32 %v928, %v934
        %v948 = vmul.f32 %v929, %v938
        %949 = vrot.lane.b32.xlu0 %v941, 2
        %v950 = vpop.permute.xlu0 %949
        %951 = vrot.lane.b32.xlu0 %v943, 2
        %v952 = vpop.permute.xlu0 %951
        %953 = vrot.lane.b32.xlu0 %v945, 2
        %v954 = vpop.permute.xlu0 %953
        %955 = vrot.lane.b32.xlu0 %v947, 2
        %v956 = vpop.permute.xlu0 %955
        %957 = vrot.lane.b32.xlu0 %v942, 2
        %v958 = vpop.permute.xlu0 %957
        %959 = vrot.lane.b32.xlu0 %v944, 2
        %v960 = vpop.permute.xlu0 %959
        %961 = vrot.lane.b32.xlu0 %v946, 2
        %v962 = vpop.permute.xlu0 %961
        %963 = vrot.lane.b32.xlu0 %v948, 2
        %v964 = vpop.permute.xlu0 %963
        %v965 = vlaneseq
        %v966 = vand.u32 %v965, 127
        %vm967 = vcmp.lt.s32.totalorder %v966, 2
        %v968 = vsel %vm967, %v950, %v958
        %v969 = vsel %vm967, %v952, %v960
        %v970 = vsel %vm967, %v954, %v962
        %v971 = vsel %vm967, %v956, %v964
        %v972 = vsel %vm967, %v958, %v950
        %v973 = vsel %vm967, %v960, %v952
        %v974 = vsel %vm967, %v962, %v954
        %v975 = vsel %vm967, %v964, %v956
        %v976 = vpack.c.bf16 %v973, %v972
        %v977 = vpack.c.bf16 %v969, %v968
        %v978 = vpack.c.bf16 %v975, %v974
        %v979 = vpack.c.bf16 %v971, %v970
        %980 = vrot.lane.b32.xlu0 %v941, 1
        %v981 = vpop.permute.xlu0 %980
        %982 = vrot.lane.b32.xlu0 %v943, 1
        %v983 = vpop.permute.xlu0 %982
        %984 = vrot.lane.b32.xlu0 %v945, 1
        %v985 = vpop.permute.xlu0 %984
        %986 = vrot.lane.b32.xlu0 %v947, 1
        %v987 = vpop.permute.xlu0 %986
        %988 = vrot.lane.b32.xlu0 %v942, 1
        %v989 = vpop.permute.xlu0 %988
        %990 = vrot.lane.b32.xlu0 %v944, 1
        %v991 = vpop.permute.xlu0 %990
        %992 = vrot.lane.b32.xlu0 %v946, 1
        %v993 = vpop.permute.xlu0 %992
        %994 = vrot.lane.b32.xlu0 %v948, 1
        %v995 = vpop.permute.xlu0 %994
        %vm996 = vcmp.lt.s32.totalorder %v966, 1
        %v997 = vsel %vm996, %v981, %v989
        %v998 = vsel %vm996, %v983, %v991
        %v999 = vsel %vm996, %v985, %v993
        %v1000 = vsel %vm996, %v987, %v995
        %v1001 = vsel %vm996, %v989, %v981
        %v1002 = vsel %vm996, %v991, %v983
        %v1003 = vsel %vm996, %v993, %v985
        %v1004 = vsel %vm996, %v995, %v987
        %v1005 = vpack.c.bf16 %v1002, %v1001
        %v1006 = vpack.c.bf16 %v998, %v997
        %v1007 = vpack.c.bf16 %v1004, %v1003
        %v1008 = vpack.c.bf16 %v1000, %v999
        %v1009 = vpack.c.bf16 %v943, %v941
        %v1010 = vpack.c.bf16 %v944, %v942
        %v1011 = vpack.c.bf16 %v947, %v945
        %v1012 = vpack.c.bf16 %v948, %v946
        %1013 = vrot.lane.b32.xlu0 %v941, 127
        %v1014 = vpop.permute.xlu0 %1013
        %1015 = vrot.lane.b32.xlu0 %v943, 127
        %v1016 = vpop.permute.xlu0 %1015
        %1017 = vrot.lane.b32.xlu0 %v945, 127
        %v1018 = vpop.permute.xlu0 %1017
        %1019 = vrot.lane.b32.xlu0 %v947, 127
        %v1020 = vpop.permute.xlu0 %1019
        %1021 = vrot.lane.b32.xlu0 %v942, 127
        %v1022 = vpop.permute.xlu0 %1021
        %1023 = vrot.lane.b32.xlu0 %v944, 127
        %v1024 = vpop.permute.xlu0 %1023
        %1025 = vrot.lane.b32.xlu0 %v946, 127
        %v1026 = vpop.permute.xlu0 %1025
        %1027 = vrot.lane.b32.xlu0 %v948, 127
        %v1028 = vpop.permute.xlu0 %1027
        %vm1029 = vcmp.lt.s32.totalorder %v966, 127
        %v1030 = vsel %vm1029, %v1014, %v1022
        %v1031 = vsel %vm1029, %v1016, %v1024
        %v1032 = vsel %vm1029, %v1018, %v1026
        %v1033 = vsel %vm1029, %v1020, %v1028
        %v1034 = vsel %vm1029, %v1022, %v1014
        %v1035 = vsel %vm1029, %v1024, %v1016
        %v1036 = vsel %vm1029, %v1026, %v1018
        %v1037 = vsel %vm1029, %v1028, %v1020
        %v1038 = vpack.c.bf16 %v1031, %v1030
        %v1039 = vpack.c.bf16 %v1035, %v1034
        %v1040 = vpack.c.bf16 %v1033, %v1032
        %v1041 = vpack.c.bf16 %v1037, %v1036
        %1042 = vrot.lane.b32.xlu0 %v941, 126
        %v1043 = vpop.permute.xlu0 %1042
        %1044 = vrot.lane.b32.xlu0 %v943, 126
        %v1045 = vpop.permute.xlu0 %1044
        %1046 = vrot.lane.b32.xlu0 %v945, 126
        %v1047 = vpop.permute.xlu0 %1046
        %1048 = vrot.lane.b32.xlu0 %v947, 126
        %v1049 = vpop.permute.xlu0 %1048
        %1050 = vrot.lane.b32.xlu0 %v942, 126
        %v1051 = vpop.permute.xlu0 %1050
        %1052 = vrot.lane.b32.xlu0 %v944, 126
        %v1053 = vpop.permute.xlu0 %1052
        %1054 = vrot.lane.b32.xlu0 %v946, 126
        %v1055 = vpop.permute.xlu0 %1054
        %1056 = vrot.lane.b32.xlu0 %v948, 126
        %v1057 = vpop.permute.xlu0 %1056
        %vm1058 = vcmp.lt.s32.totalorder %v966, 126
        %v1059 = vsel %vm1058, %v1043, %v1051
        %v1060 = vsel %vm1058, %v1045, %v1053
        %v1061 = vsel %vm1058, %v1047, %v1055
        %v1062 = vsel %vm1058, %v1049, %v1057
        %v1063 = vsel %vm1058, %v1051, %v1043
        %v1064 = vsel %vm1058, %v1053, %v1045
        %v1065 = vsel %vm1058, %v1055, %v1047
        %v1066 = vsel %vm1058, %v1057, %v1049
        %v1067 = vpack.c.bf16 %v1060, %v1059
        %v1068 = vpack.c.bf16 %v1064, %v1063
        %v1069 = vpack.c.bf16 %v1062, %v1061
        %v1070 = vpack.c.bf16 %v1066, %v1065
        %v1071 = vld [vmem:[%s532] sm:$0xff]
        %v1072 = vld [vmem:[%s532 + $0x8] sm:$0xff]
        %v1073 = vld [vmem:[%s532 + $0x10] sm:$0xff]
        %v1074 = vld [vmem:[%s532 + $0x18] sm:$0xff]
        %v1075 = vld [vmem:[%s532 + $0x20] sm:$0xff]
        %v1076 = vld [vmem:[%s532 + $0x28] sm:$0xff]
        %v1077 = vld [vmem:[%s532 + $0x30] sm:$0xff]
        %v1078 = vld [vmem:[%s532 + $0x38] sm:$0xff]
        %v1079 = vld [vmem:[%s541] sm:$0xff]
        %v1080 = vld [vmem:[%s541 + $0x8] sm:$0xff]
        %v1081 = vld [vmem:[%s541 + $0x10] sm:$0xff]
        %v1082 = vld [vmem:[%s541 + $0x18] sm:$0xff]
        %v1083 = vld [vmem:[%s541 + $0x20] sm:$0xff]
        %v1084 = vld [vmem:[%s541 + $0x28] sm:$0xff]
        %v1085 = vld [vmem:[%s541 + $0x30] sm:$0xff]
        %v1086 = vld [vmem:[%s541 + $0x38] sm:$0xff]
        %1088 = vset.pattern.permute.xlu0 0
        %1089 = vperm.xlu0 %1088, %v1079
        %v1090 = vpop.permute.xlu0 %1089
        %1093 = vset.pattern.permute.xlu0 0
        %1094 = vperm.xlu0 %1093, %v1080
        %v1095 = vpop.permute.xlu0 %1094
        %1098 = vset.pattern.permute.xlu0 0
        %1099 = vperm.xlu0 %1098, %v1081
        %v1100 = vpop.permute.xlu0 %1099
        %1103 = vset.pattern.permute.xlu0 0
        %1104 = vperm.xlu0 %1103, %v1082
        %v1105 = vpop.permute.xlu0 %1104
        %1108 = vset.pattern.permute.xlu0 0
        %1109 = vperm.xlu0 %1108, %v1083
        %v1110 = vpop.permute.xlu0 %1109
        %1113 = vset.pattern.permute.xlu0 0
        %1114 = vperm.xlu0 %1113, %v1084
        %v1115 = vpop.permute.xlu0 %1114
        %1118 = vset.pattern.permute.xlu0 0
        %1119 = vperm.xlu0 %1118, %v1085
        %v1120 = vpop.permute.xlu0 %1119
        %1123 = vset.pattern.permute.xlu0 0
        %1124 = vperm.xlu0 %1123, %v1086
        %v1125 = vpop.permute.xlu0 %1124
        %v1135 = vunpack.c.l.b16 %v1071
        %v1136 = vunpack.c.h.b16 %v1071
        %v1137 = vunpack.c.l.b16 %v1072
        %v1138 = vunpack.c.h.b16 %v1072
        %v1139 = vunpack.c.l.b16 %v1073
        %v1140 = vunpack.c.h.b16 %v1073
        %v1141 = vunpack.c.l.b16 %v1074
        %v1142 = vunpack.c.h.b16 %v1074
        %v1143 = vunpack.c.l.b16 %v1075
        %v1144 = vunpack.c.h.b16 %v1075
        %v1145 = vunpack.c.l.b16 %v1076
        %v1146 = vunpack.c.h.b16 %v1076
        %v1147 = vunpack.c.l.b16 %v1077
        %v1148 = vunpack.c.h.b16 %v1077
        %v1149 = vunpack.c.l.b16 %v1078
        %v1150 = vunpack.c.h.b16 %v1078
        %v1151 = vpack.c.b16 %v1137, %v1135
        %v1152 = vpack.c.b16 %v1138, %v1136
        %v1153 = vpack.c.b16 %v1141, %v1139
        %v1154 = vpack.c.b16 %v1142, %v1140
        %v1155 = vpack.c.b16 %v1145, %v1143
        %v1156 = vpack.c.b16 %v1146, %v1144
        %v1157 = vpack.c.b16 %v1149, %v1147
        %v1158 = vpack.c.b16 %v1150, %v1148
        %vm1163 = vcmask 261120
        %v1165 = vsel %vm1163, %v1152, 0
        %v1168 = vsel %vm1163, %v1154, 0
        %v1171 = vsel %vm1163, %v1156, 0
        %v1174 = vsel %vm1163, %v1158, 0
        %1176 = vmatprep.subr.bf16.mxu0 %v1041
        %1177 = vmatpush1.bf16.msra.mxu0 %v1040
        %1178 = vmatprep.subr.bf16.mxu0 %v1039
        %1179 = vmatpush1.bf16.msra.mxu0 %v1038
        %1180 = vmatprep.subr.bf16.mxu0 %v1012
        %1181 = vmatpush1.bf16.msra.mxu0 %v1011
        %1182 = vmatprep.subr.bf16.mxu0 %v1010
        %1183 = vmatpush1.bf16.msra.mxu0 %v1009
        %1184 = vmatprep.subr.bf16.mxu0 %v1008
        %1185 = vmatpush1.bf16.msra.mxu0 %v1007
        %1186 = vmatprep.subr.bf16.mxu0 %v1006
        %1187 = vmatpush1.bf16.msra.mxu0 %v1005
        %1188 = vmatprep.subr.bf16.mxu0 %v979
        %1189 = vmatpush1.bf16.msra.mxu0 %v978
        %1190 = vmatprep.subr.bf16.mxu0 %v977
        %1191 = vmatpush1.bf16.msra.mxu0 %v976
        %1192 = vmatprep.subr.bf16.mxu0 0
        %1193 = vmatpush2.bf16.msra.mxu0 0
        %1194 = vmatprep.subr.bf16.mxu0 0
        %1195 = vmatpush2.bf16.msra.mxu0 0
        %1196 = vmatprep.subr.bf16.mxu0 0
        %1197 = vmatpush2.bf16.msra.mxu0 0
        %1198 = vmatprep.subr.bf16.mxu0 0
        %1199 = vmatpush2.bf16.msra.mxu0 0
        %1200 = vmatprep.subr.bf16.mxu0 0
        %1201 = vmatpush2.bf16.msra.mxu0 0
        %1202 = vmatprep.subr.bf16.mxu0 0
        %1203 = vmatpush2.bf16.msra.mxu0 0
        %1204 = vmatprep.subr.bf16.mxu0 %v1070
        %1205 = vmatpush2.bf16.msra.mxu0 %v1069
        %1206 = vmatprep.subr.bf16.mxu0 %v1068
        %1207 = vmatpush2.bf16.msra.mxu0 %v1067
        %1208 = vmatprep.mubr.bf16.mxu0 %v1165
        %1209 = vmatmul.mubr.bf16.gmra.mxu0 %v1151
        %v1210 = vpop.f32.mrf.mxu0
        %v1211 = vadd.f32 %v1090, %v1210
        %v1212 = vpop.f32.mrf.mxu0
        %v1213 = vadd.f32 %v1090, %v1212
        %v1214 = vpop.f32.mrf.mxu0
        %v1215 = vadd.f32 %v1095, %v1214
        %v1216 = vpop.f32.mrf.mxu0
        %v1217 = vadd.f32 %v1095, %v1216
        %1218 = vmatprep.mubr.bf16.mxu0 %v1168
        %1219 = vmatmul.mubr.bf16.gmra.mxu0 %v1153
        %v1220 = vpop.f32.mrf.mxu0
        %v1221 = vadd.f32 %v1100, %v1220
        %v1222 = vpop.f32.mrf.mxu0
        %v1223 = vadd.f32 %v1100, %v1222
        %v1224 = vpop.f32.mrf.mxu0
        %v1225 = vadd.f32 %v1105, %v1224
        %v1226 = vpop.f32.mrf.mxu0
        %v1227 = vadd.f32 %v1105, %v1226
        %1228 = vmatprep.mubr.bf16.mxu0 %v1171
        %1229 = vmatmul.mubr.bf16.gmra.mxu0 %v1155
        %v1230 = vpop.f32.mrf.mxu0
        %v1231 = vadd.f32 %v1110, %v1230
        %v1232 = vpop.f32.mrf.mxu0
        %v1233 = vadd.f32 %v1110, %v1232
        %v1234 = vpop.f32.mrf.mxu0
        %v1235 = vadd.f32 %v1115, %v1234
        %v1236 = vpop.f32.mrf.mxu0
        %v1237 = vadd.f32 %v1115, %v1236
        %1238 = vmatprep.mubr.bf16.mxu0 %v1174
        %1239 = vmatmul.mubr.bf16.gmra.mxu0 %v1157
        %v1240 = vpop.f32.mrf.mxu0
        %v1241 = vadd.f32 %v1120, %v1240
        %v1242 = vpop.f32.mrf.mxu0
        %v1243 = vadd.f32 %v1120, %v1242
        %v1244 = vpop.f32.mrf.mxu0
        %v1245 = vadd.f32 %v1125, %v1244
        %v1246 = vpop.f32.mrf.mxu0
        %v1247 = vadd.f32 %v1125, %v1246
        %1248 = vdwg.mxu0
        %v1249 = vtanh.pop %v1211
        %v1250 = vtanh.pop %v1213
        %v1251 = vtanh.pop %v1215
        %v1252 = vtanh.pop %v1217
        %v1253 = vtanh.pop %v1221
        %v1254 = vtanh.pop %v1223
        %v1255 = vtanh.pop %v1225
        %v1256 = vtanh.pop %v1227
        %v1257 = vxor.u32 %v1231, 2147483648
        %v1258 = vxor.u32 %v1233, 2147483648
        %v1259 = vxor.u32 %v1235, 2147483648
        %v1260 = vxor.u32 %v1237, 2147483648
        %v1261 = vxor.u32 %v1241, 2147483648
        %v1262 = vxor.u32 %v1243, 2147483648
        %v1263 = vxor.u32 %v1245, 2147483648
        %v1264 = vxor.u32 %v1247, 2147483648
        %v1265 = vmul.f32 %v1257, 1.442695
        %v1266 = vpow.pop %v1265
        %v1267 = vmul.f32 %v1258, 1.442695
        %v1268 = vpow.pop %v1267
        %v1269 = vmul.f32 %v1259, 1.442695
        %v1270 = vpow.pop %v1269
        %v1271 = vmul.f32 %v1260, 1.442695
        %v1272 = vpow.pop %v1271
        %v1273 = vmul.f32 %v1261, 1.442695
        %v1274 = vpow.pop %v1273
        %v1275 = vmul.f32 %v1262, 1.442695
        %v1276 = vpow.pop %v1275
        %v1277 = vmul.f32 %v1263, 1.442695
        %v1278 = vpow.pop %v1277
        %v1279 = vmul.f32 %v1264, 1.442695
        %v1280 = vpow.pop %v1279
        %v1281 = vadd.f32 %v1266, 1.0
        %v1282 = vadd.f32 %v1268, 1.0
        %v1283 = vadd.f32 %v1270, 1.0
        %v1284 = vadd.f32 %v1272, 1.0
        %v1285 = vadd.f32 %v1274, 1.0
        %v1286 = vadd.f32 %v1276, 1.0
        %v1287 = vadd.f32 %v1278, 1.0
        %v1288 = vadd.f32 %v1280, 1.0
        %v1289 = vrcp.pop %v1281
        %v1290 = vmul.f32 1.0, %v1289
        %v1291 = vrcp.pop %v1282
        %v1292 = vmul.f32 1.0, %v1291
        %v1293 = vrcp.pop %v1283
        %v1294 = vmul.f32 1.0, %v1293
        %v1295 = vrcp.pop %v1284
        %v1296 = vmul.f32 1.0, %v1295
        %v1297 = vrcp.pop %v1285
        %v1298 = vmul.f32 1.0, %v1297
        %v1299 = vrcp.pop %v1286
        %v1300 = vmul.f32 1.0, %v1299
        %v1301 = vrcp.pop %v1287
        %v1302 = vmul.f32 1.0, %v1301
        %v1303 = vrcp.pop %v1288
        %v1304 = vmul.f32 1.0, %v1303
        %v1305 = vmul.f32 %v1249, %v1290
        %v1306 = vmul.f32 %v1250, %v1292
        %v1307 = vmul.f32 %v1251, %v1294
        %v1308 = vmul.f32 %v1252, %v1296
        %v1309 = vmul.f32 %v1253, %v1298
        %v1310 = vmul.f32 %v1254, %v1300
        %v1311 = vmul.f32 %v1255, %v1302
        %v1312 = vmul.f32 %v1256, %v1304
        %v1313 = vld [vmem:[%s550] sm:$0xf]
        %v1314 = vld [vmem:[%s550 + $0x4] sm:$0xf]
        %v1315 = vld [vmem:[%s550 + $0x8] sm:$0xf]
        %v1316 = vld [vmem:[%s550 + $0xc] sm:$0xf]
        %v1317 = vld [vmem:[%s550 + $0x10] sm:$0xf]
        %v1318 = vld [vmem:[%s550 + $0x14] sm:$0xf]
        %v1319 = vld [vmem:[%s550 + $0x18] sm:$0xf]
        %v1320 = vld [vmem:[%s550 + $0x1c] sm:$0xf]
        %v1321 = vpack.c.bf16 %v1307, %v1305
        %v1322 = vpack.c.bf16 %v1308, %v1306
        %v1323 = vpack.c.bf16 %v1311, %v1309
        %v1324 = vpack.c.bf16 %v1312, %v1310
        %v1325 = vld [vmem:[%s559] sm:$0xff]
        %v1326 = vld [vmem:[%s559 + $0x8] sm:$0xff]
        %v1327 = vld [vmem:[%s559 + $0x10] sm:$0xff]
        %v1328 = vld [vmem:[%s559 + $0x18] sm:$0xff]
        %v1329 = vld [vmem:[%s559 + $0x20] sm:$0xff]
        %v1330 = vld [vmem:[%s559 + $0x28] sm:$0xff]
        %v1331 = vld [vmem:[%s559 + $0x30] sm:$0xff]
        %v1332 = vld [vmem:[%s559 + $0x38] sm:$0xff]
        %1334 = vset.pattern.permute.xlu0 0
        %1335 = vperm.xlu0 %1334, %v1325
        %v1336 = vpop.permute.xlu0 %1335
        %1339 = vset.pattern.permute.xlu0 0
        %1340 = vperm.xlu0 %1339, %v1326
        %v1341 = vpop.permute.xlu0 %1340
        %1344 = vset.pattern.permute.xlu0 0
        %1345 = vperm.xlu0 %1344, %v1327
        %v1346 = vpop.permute.xlu0 %1345
        %1349 = vset.pattern.permute.xlu0 0
        %1350 = vperm.xlu0 %1349, %v1328
        %v1351 = vpop.permute.xlu0 %1350
        %1354 = vset.pattern.permute.xlu0 0
        %1355 = vperm.xlu0 %1354, %v1329
        %v1356 = vpop.permute.xlu0 %1355
        %1359 = vset.pattern.permute.xlu0 0
        %1360 = vperm.xlu0 %1359, %v1330
        %v1361 = vpop.permute.xlu0 %1360
        %1364 = vset.pattern.permute.xlu0 0
        %1365 = vperm.xlu0 %1364, %v1331
        %v1366 = vpop.permute.xlu0 %1365
        %1369 = vset.pattern.permute.xlu0 0
        %1370 = vperm.xlu0 %1369, %v1332
        %v1371 = vpop.permute.xlu0 %1370
        %v1381 = vunpack.c.l.b16 %v1313
        %v1382 = vunpack.c.l.b16 %v1314
        %v1383 = vunpack.c.l.b16 %v1315
        %v1384 = vunpack.c.l.b16 %v1316
        %v1385 = vunpack.c.l.b16 %v1317
        %v1386 = vunpack.c.l.b16 %v1318
        %v1387 = vunpack.c.l.b16 %v1319
        %v1388 = vunpack.c.l.b16 %v1320
        %v1389 = vpack.c.b16 %v1382, %v1381
        %v1390 = vpack.c.b16 %v1384, %v1383
        %v1391 = vpack.c.b16 %v1386, %v1385
        %v1392 = vpack.c.b16 %v1388, %v1387
        %v1394 = vsel %vm1163, %v1389, 0
        %v1397 = vsel %vm1163, %v1390, 0
        %v1400 = vsel %vm1163, %v1391, 0
        %v1403 = vsel %vm1163, %v1392, 0
        %1405 = vmatprep.subr.bf16.mxu0 0
        %1406 = vmatpush1.bf16.msra.mxu0 0
        %1407 = vmatprep.subr.bf16.mxu0 0
        %1408 = vmatpush1.bf16.msra.mxu0 0
        %1409 = vmatprep.subr.bf16.mxu0 0
        %1410 = vmatpush1.bf16.msra.mxu0 0
        %1411 = vmatprep.subr.bf16.mxu0 0
        %1412 = vmatpush1.bf16.msra.mxu0 0
        %1413 = vmatprep.subr.bf16.mxu0 0
        %1414 = vmatpush1.bf16.msra.mxu0 0
        %1415 = vmatprep.subr.bf16.mxu0 0
        %1416 = vmatpush1.bf16.msra.mxu0 0
        %1417 = vmatprep.subr.bf16.mxu0 %v1324
        %1418 = vmatpush1.bf16.msra.mxu0 %v1323
        %1419 = vmatprep.subr.bf16.mxu0 %v1322
        %1420 = vmatpush1.bf16.msra.mxu0 %v1321
        %1421 = vmatprep.subr.bf16.mxu0 0
        %1422 = vmatpush2.bf16.msra.mxu0 0
        %1423 = vmatprep.subr.bf16.mxu0 0
        %1424 = vmatpush2.bf16.msra.mxu0 0
        %1425 = vmatprep.subr.bf16.mxu0 0
        %1426 = vmatpush2.bf16.msra.mxu0 0
        %1427 = vmatprep.subr.bf16.mxu0 0
        %1428 = vmatpush2.bf16.msra.mxu0 0
        %1429 = vmatprep.subr.bf16.mxu0 0
        %1430 = vmatpush2.bf16.msra.mxu0 0
        %1431 = vmatprep.subr.bf16.mxu0 0
        %1432 = vmatpush2.bf16.msra.mxu0 0
        %1433 = vmatprep.subr.bf16.mxu0 0
        %1434 = vmatpush2.bf16.msra.mxu0 0
        %1435 = vmatprep.subr.bf16.mxu0 0
        %1436 = vmatpush2.bf16.msra.mxu0 0
        %1437 = vmatprep.mubr.bf16.mxu0 0
        %1438 = vmatmul.mubr.bf16.gmra.mxu0 %v1394
        %v1439 = vpop.f32.mrf.mxu0
        %v1440 = vadd.f32 %v1336, %v1439
        %v1441 = vpop.f32.mrf.mxu0
        %v1442 = vadd.f32 %v1336, %v1441
        %v1443 = vpop.f32.mrf.mxu0
        %v1444 = vadd.f32 %v1341, %v1443
        %v1445 = vpop.f32.mrf.mxu0
        %v1446 = vadd.f32 %v1341, %v1445
        %1447 = vmatprep.mubr.bf16.mxu0 0
        %1448 = vmatmul.mubr.bf16.gmra.mxu0 %v1397
        %v1449 = vpop.f32.mrf.mxu0
        %v1450 = vadd.f32 %v1346, %v1449
        %v1451 = vpop.f32.mrf.mxu0
        %v1452 = vadd.f32 %v1346, %v1451
        %v1453 = vpop.f32.mrf.mxu0
        %v1454 = vadd.f32 %v1351, %v1453
        %v1455 = vpop.f32.mrf.mxu0
        %v1456 = vadd.f32 %v1351, %v1455
        %1457 = vmatprep.mubr.bf16.mxu0 0
        %1458 = vmatmul.mubr.bf16.gmra.mxu0 %v1400
        %v1459 = vpop.f32.mrf.mxu0
        %v1460 = vadd.f32 %v1356, %v1459
        %v1461 = vpop.f32.mrf.mxu0
        %v1462 = vadd.f32 %v1356, %v1461
        %v1463 = vpop.f32.mrf.mxu0
        %v1464 = vadd.f32 %v1361, %v1463
        %v1465 = vpop.f32.mrf.mxu0
        %v1466 = vadd.f32 %v1361, %v1465
        %1467 = vmatprep.mubr.bf16.mxu0 0
        %1468 = vmatmul.mubr.bf16.gmra.mxu0 %v1403
        %v1469 = vpop.f32.mrf.mxu0
        %v1470 = vadd.f32 %v1366, %v1469
        %v1471 = vpop.f32.mrf.mxu0
        %v1472 = vadd.f32 %v1366, %v1471
        %v1473 = vpop.f32.mrf.mxu0
        %v1474 = vadd.f32 %v1371, %v1473
        %v1475 = vpop.f32.mrf.mxu0
        %v1476 = vadd.f32 %v1371, %v1475
        %1477 = vdwg.mxu0
        %v1478 = vadd.f32 %v941, %v1440
        %v1479 = vadd.f32 %v942, %v1442
        %v1480 = vadd.f32 %v943, %v1444
        %v1481 = vadd.f32 %v944, %v1446
        %v1482 = vadd.f32 %v945, %v1450
        %v1483 = vadd.f32 %v946, %v1452
        %v1484 = vadd.f32 %v947, %v1454
        %v1485 = vadd.f32 %v948, %v1456
        %v1486 = vmul.f32 %v1478, %v934
        %v1487 = vmul.f32 %v1479, %v938
        %v1488 = vmul.f32 %v1480, %v934
        %v1489 = vmul.f32 %v1481, %v938
        %v1490 = vmul.f32 %v1482, %v934
        %v1491 = vmul.f32 %v1483, %v938
        %v1492 = vmul.f32 %v1484, %v934
        %v1493 = vmul.f32 %v1485, %v938
        %v1494 = vadd.f32 %v1460, 0.0
        %v1495 = vadd.f32 %v1462, 0.0
        %v1496 = vadd.f32 %v1464, 0.0
        %v1497 = vadd.f32 %v1466, 0.0
        %v1498 = vadd.f32 %v1470, 0.0
        %v1499 = vadd.f32 %v1472, 0.0
        %v1500 = vadd.f32 %v1474, 0.0
        %v1501 = vadd.f32 %v1476, 0.0
        %1502 = vrot.lane.b32.xlu0 %v1486, 2
        %v1503 = vpop.permute.xlu0 %1502
        %1504 = vrot.lane.b32.xlu0 %v1488, 2
        %v1505 = vpop.permute.xlu0 %1504
        %1506 = vrot.lane.b32.xlu0 %v1490, 2
        %v1507 = vpop.permute.xlu0 %1506
        %1508 = vrot.lane.b32.xlu0 %v1492, 2
        %v1509 = vpop.permute.xlu0 %1508
        %1510 = vrot.lane.b32.xlu0 %v1487, 2
        %v1511 = vpop.permute.xlu0 %1510
        %1512 = vrot.lane.b32.xlu0 %v1489, 2
        %v1513 = vpop.permute.xlu0 %1512
        %1514 = vrot.lane.b32.xlu0 %v1491, 2
        %v1515 = vpop.permute.xlu0 %1514
        %1516 = vrot.lane.b32.xlu0 %v1493, 2
        %v1517 = vpop.permute.xlu0 %1516
        %v1518 = vsel %vm967, %v1503, %v1511
        %v1519 = vsel %vm967, %v1505, %v1513
        %v1520 = vsel %vm967, %v1507, %v1515
        %v1521 = vsel %vm967, %v1509, %v1517
        %v1522 = vsel %vm967, %v1511, %v1503
        %v1523 = vsel %vm967, %v1513, %v1505
        %v1524 = vsel %vm967, %v1515, %v1507
        %v1525 = vsel %vm967, %v1517, %v1509
        %v1526 = vpack.c.bf16 %v1523, %v1522
        %v1527 = vpack.c.bf16 %v1519, %v1518
        %v1528 = vpack.c.bf16 %v1525, %v1524
        %v1529 = vpack.c.bf16 %v1521, %v1520
        %1530 = vrot.lane.b32.xlu0 %v1486, 1
        %v1531 = vpop.permute.xlu0 %1530
        %1532 = vrot.lane.b32.xlu0 %v1488, 1
        %v1533 = vpop.permute.xlu0 %1532
        %1534 = vrot.lane.b32.xlu0 %v1490, 1
        %v1535 = vpop.permute.xlu0 %1534
        %1536 = vrot.lane.b32.xlu0 %v1492, 1
        %v1537 = vpop.permute.xlu0 %1536
        %1538 = vrot.lane.b32.xlu0 %v1487, 1
        %v1539 = vpop.permute.xlu0 %1538
        %1540 = vrot.lane.b32.xlu0 %v1489, 1
        %v1541 = vpop.permute.xlu0 %1540
        %1542 = vrot.lane.b32.xlu0 %v1491, 1
        %v1543 = vpop.permute.xlu0 %1542
        %1544 = vrot.lane.b32.xlu0 %v1493, 1
        %v1545 = vpop.permute.xlu0 %1544
        %v1546 = vsel %vm996, %v1531, %v1539
        %v1547 = vsel %vm996, %v1533, %v1541
        %v1548 = vsel %vm996, %v1535, %v1543
        %v1549 = vsel %vm996, %v1537, %v1545
        %v1550 = vsel %vm996, %v1539, %v1531
        %v1551 = vsel %vm996, %v1541, %v1533
        %v1552 = vsel %vm996, %v1543, %v1535
        %v1553 = vsel %vm996, %v1545, %v1537
        %v1554 = vpack.c.bf16 %v1551, %v1550
        %v1555 = vpack.c.bf16 %v1547, %v1546
        %v1556 = vpack.c.bf16 %v1553, %v1552
        %v1557 = vpack.c.bf16 %v1549, %v1548
        %v1558 = vpack.c.bf16 %v1488, %v1486
        %v1559 = vpack.c.bf16 %v1489, %v1487
        %v1560 = vpack.c.bf16 %v1492, %v1490
        %v1561 = vpack.c.bf16 %v1493, %v1491
        %1562 = vrot.lane.b32.xlu0 %v1486, 127
        %v1563 = vpop.permute.xlu0 %1562
        %1564 = vrot.lane.b32.xlu0 %v1488, 127
        %v1565 = vpop.permute.xlu0 %1564
        %1566 = vrot.lane.b32.xlu0 %v1490, 127
        %v1567 = vpop.permute.xlu0 %1566
        %1568 = vrot.lane.b32.xlu0 %v1492, 127
        %v1569 = vpop.permute.xlu0 %1568
        %1570 = vrot.lane.b32.xlu0 %v1487, 127
        %v1571 = vpop.permute.xlu0 %1570
        %1572 = vrot.lane.b32.xlu0 %v1489, 127
        %v1573 = vpop.permute.xlu0 %1572
        %1574 = vrot.lane.b32.xlu0 %v1491, 127
        %v1575 = vpop.permute.xlu0 %1574
        %1576 = vrot.lane.b32.xlu0 %v1493, 127
        %v1577 = vpop.permute.xlu0 %1576
        %v1578 = vsel %vm1029, %v1563, %v1571
        %v1579 = vsel %vm1029, %v1565, %v1573
        %v1580 = vsel %vm1029, %v1567, %v1575
        %v1581 = vsel %vm1029, %v1569, %v1577
        %v1582 = vsel %vm1029, %v1571, %v1563
        %v1583 = vsel %vm1029, %v1573, %v1565
        %v1584 = vsel %vm1029, %v1575, %v1567
        %v1585 = vsel %vm1029, %v1577, %v1569
        %v1586 = vpack.c.bf16 %v1579, %v1578
        %v1587 = vpack.c.bf16 %v1583, %v1582
        %v1588 = vpack.c.bf16 %v1581, %v1580
        %v1589 = vpack.c.bf16 %v1585, %v1584
        %1590 = vrot.lane.b32.xlu0 %v1486, 126
        %v1591 = vpop.permute.xlu0 %1590
        %1592 = vrot.lane.b32.xlu0 %v1488, 126
        %v1593 = vpop.permute.xlu0 %1592
        %1594 = vrot.lane.b32.xlu0 %v1490, 126
        %v1595 = vpop.permute.xlu0 %1594
        %1596 = vrot.lane.b32.xlu0 %v1492, 126
        %v1597 = vpop.permute.xlu0 %1596
        %1598 = vrot.lane.b32.xlu0 %v1487, 126
        %v1599 = vpop.permute.xlu0 %1598
        %1600 = vrot.lane.b32.xlu0 %v1489, 126
        %v1601 = vpop.permute.xlu0 %1600
        %1602 = vrot.lane.b32.xlu0 %v1491, 126
        %v1603 = vpop.permute.xlu0 %1602
        %1604 = vrot.lane.b32.xlu0 %v1493, 126
        %v1605 = vpop.permute.xlu0 %1604
        %v1606 = vsel %vm1058, %v1591, %v1599
        %v1607 = vsel %vm1058, %v1593, %v1601
        %v1608 = vsel %vm1058, %v1595, %v1603
        %v1609 = vsel %vm1058, %v1597, %v1605
        %v1610 = vsel %vm1058, %v1599, %v1591
        %v1611 = vsel %vm1058, %v1601, %v1593
        %v1612 = vsel %vm1058, %v1603, %v1595
        %v1613 = vsel %vm1058, %v1605, %v1597
        %v1614 = vpack.c.bf16 %v1607, %v1606
        %v1615 = vpack.c.bf16 %v1611, %v1610
        %v1616 = vpack.c.bf16 %v1609, %v1608
        %v1617 = vpack.c.bf16 %v1613, %v1612
        %s1618 = scalar_lea.vmem %s532, 64 [#allocation2]
        %v1619 = vld [vmem:[%s1618] sm:$0xff]
        %v1620 = vld [vmem:[%s1618 + $0x8] sm:$0xff]
        %v1621 = vld [vmem:[%s1618 + $0x10] sm:$0xff]
        %v1622 = vld [vmem:[%s1618 + $0x18] sm:$0xff]
        %v1623 = vld [vmem:[%s1618 + $0x20] sm:$0xff]
        %v1624 = vld [vmem:[%s1618 + $0x28] sm:$0xff]
        %v1625 = vld [vmem:[%s1618 + $0x30] sm:$0xff]
        %v1626 = vld [vmem:[%s1618 + $0x38] sm:$0xff]
        %s1627 = scalar_lea.vmem %s541, 64 [#allocation5]
        %v1628 = vld [vmem:[%s1627] sm:$0xff]
        %v1629 = vld [vmem:[%s1627 + $0x8] sm:$0xff]
        %v1630 = vld [vmem:[%s1627 + $0x10] sm:$0xff]
        %v1631 = vld [vmem:[%s1627 + $0x18] sm:$0xff]
        %v1632 = vld [vmem:[%s1627 + $0x20] sm:$0xff]
        %v1633 = vld [vmem:[%s1627 + $0x28] sm:$0xff]
        %v1634 = vld [vmem:[%s1627 + $0x30] sm:$0xff]
        %v1635 = vld [vmem:[%s1627 + $0x38] sm:$0xff]
        %1637 = vset.pattern.permute.xlu0 0
        %1638 = vperm.xlu0 %1637, %v1628
        %v1639 = vpop.permute.xlu0 %1638
        %1642 = vset.pattern.permute.xlu0 0
        %1643 = vperm.xlu0 %1642, %v1629
        %v1644 = vpop.permute.xlu0 %1643
        %1647 = vset.pattern.permute.xlu0 0
        %1648 = vperm.xlu0 %1647, %v1630
        %v1649 = vpop.permute.xlu0 %1648
        %1652 = vset.pattern.permute.xlu0 0
        %1653 = vperm.xlu0 %1652, %v1631
        %v1654 = vpop.permute.xlu0 %1653
        %1657 = vset.pattern.permute.xlu0 0
        %1658 = vperm.xlu0 %1657, %v1632
        %v1659 = vpop.permute.xlu0 %1658
        %1662 = vset.pattern.permute.xlu0 0
        %1663 = vperm.xlu0 %1662, %v1633
        %v1664 = vpop.permute.xlu0 %1663
        %1667 = vset.pattern.permute.xlu0 0
        %1668 = vperm.xlu0 %1667, %v1634
        %v1669 = vpop.permute.xlu0 %1668
        %1672 = vset.pattern.permute.xlu0 0
        %1673 = vperm.xlu0 %1672, %v1635
        %v1674 = vpop.permute.xlu0 %1673
        %v1684 = vunpack.c.l.b16 %v1619
        %v1685 = vunpack.c.h.b16 %v1619
        %v1686 = vunpack.c.l.b16 %v1620
        %v1687 = vunpack.c.h.b16 %v1620
        %v1688 = vunpack.c.l.b16 %v1621
        %v1689 = vunpack.c.h.b16 %v1621
        %v1690 = vunpack.c.l.b16 %v1622
        %v1691 = vunpack.c.h.b16 %v1622
        %v1692 = vunpack.c.l.b16 %v1623
        %v1693 = vunpack.c.h.b16 %v1623
        %v1694 = vunpack.c.l.b16 %v1624
        %v1695 = vunpack.c.h.b16 %v1624
        %v1696 = vunpack.c.l.b16 %v1625
        %v1697 = vunpack.c.h.b16 %v1625
        %v1698 = vunpack.c.l.b16 %v1626
        %v1699 = vunpack.c.h.b16 %v1626
        %v1700 = vpack.c.b16 %v1686, %v1684
        %v1701 = vpack.c.b16 %v1687, %v1685
        %v1702 = vpack.c.b16 %v1690, %v1688
        %v1703 = vpack.c.b16 %v1691, %v1689
        %v1704 = vpack.c.b16 %v1694, %v1692
        %v1705 = vpack.c.b16 %v1695, %v1693
        %v1706 = vpack.c.b16 %v1698, %v1696
        %v1707 = vpack.c.b16 %v1699, %v1697
        %v1713 = vsel %vm1163, %v1701, 0
        %v1716 = vsel %vm1163, %v1703, 0
        %v1719 = vsel %vm1163, %v1705, 0
        %v1722 = vsel %vm1163, %v1707, 0
        %1724 = vmatprep.subr.bf16.mxu0 %v1589
        %1725 = vmatpush1.bf16.msra.mxu0 %v1588
        %1726 = vmatprep.subr.bf16.mxu0 %v1587
        %1727 = vmatpush1.bf16.msra.mxu0 %v1586
        %1728 = vmatprep.subr.bf16.mxu0 %v1561
        %1729 = vmatpush1.bf16.msra.mxu0 %v1560
        %1730 = vmatprep.subr.bf16.mxu0 %v1559
        %1731 = vmatpush1.bf16.msra.mxu0 %v1558
        %1732 = vmatprep.subr.bf16.mxu0 %v1557
        %1733 = vmatpush1.bf16.msra.mxu0 %v1556
        %1734 = vmatprep.subr.bf16.mxu0 %v1555
        %1735 = vmatpush1.bf16.msra.mxu0 %v1554
        %1736 = vmatprep.subr.bf16.mxu0 %v1529
        %1737 = vmatpush1.bf16.msra.mxu0 %v1528
        %1738 = vmatprep.subr.bf16.mxu0 %v1527
        %1739 = vmatpush1.bf16.msra.mxu0 %v1526
        %1740 = vmatprep.subr.bf16.mxu0 0
        %1741 = vmatpush2.bf16.msra.mxu0 0
        %1742 = vmatprep.subr.bf16.mxu0 0
        %1743 = vmatpush2.bf16.msra.mxu0 0
        %1744 = vmatprep.subr.bf16.mxu0 0
        %1745 = vmatpush2.bf16.msra.mxu0 0
        %1746 = vmatprep.subr.bf16.mxu0 0
        %1747 = vmatpush2.bf16.msra.mxu0 0
        %1748 = vmatprep.subr.bf16.mxu0 0
        %1749 = vmatpush2.bf16.msra.mxu0 0
        %1750 = vmatprep.subr.bf16.mxu0 0
        %1751 = vmatpush2.bf16.msra.mxu0 0
        %1752 = vmatprep.subr.bf16.mxu0 %v1617
        %1753 = vmatpush2.bf16.msra.mxu0 %v1616
        %1754 = vmatprep.subr.bf16.mxu0 %v1615
        %1755 = vmatpush2.bf16.msra.mxu0 %v1614
        %1756 = vmatprep.mubr.bf16.mxu0 %v1713
        %1757 = vmatmul.mubr.bf16.gmra.mxu0 %v1700
        %v1758 = vpop.f32.mrf.mxu0
        %v1759 = vadd.f32 %v1639, %v1758
        %v1760 = vpop.f32.mrf.mxu0
        %v1761 = vadd.f32 %v1639, %v1760
        %v1762 = vpop.f32.mrf.mxu0
        %v1763 = vadd.f32 %v1644, %v1762
        %v1764 = vpop.f32.mrf.mxu0
        %v1765 = vadd.f32 %v1644, %v1764
        %1766 = vmatprep.mubr.bf16.mxu0 %v1716
        %1767 = vmatmul.mubr.bf16.gmra.mxu0 %v1702
        %v1768 = vpop.f32.mrf.mxu0
        %v1769 = vadd.f32 %v1649, %v1768
        %v1770 = vpop.f32.mrf.mxu0
        %v1771 = vadd.f32 %v1649, %v1770
        %v1772 = vpop.f32.mrf.mxu0
        %v1773 = vadd.f32 %v1654, %v1772
        %v1774 = vpop.f32.mrf.mxu0
        %v1775 = vadd.f32 %v1654, %v1774
        %1776 = vmatprep.mubr.bf16.mxu0 %v1719
        %1777 = vmatmul.mubr.bf16.gmra.mxu0 %v1704
        %v1778 = vpop.f32.mrf.mxu0
        %v1779 = vadd.f32 %v1659, %v1778
        %v1780 = vpop.f32.mrf.mxu0
        %v1781 = vadd.f32 %v1659, %v1780
        %v1782 = vpop.f32.mrf.mxu0
        %v1783 = vadd.f32 %v1664, %v1782
        %v1784 = vpop.f32.mrf.mxu0
        %v1785 = vadd.f32 %v1664, %v1784
        %1786 = vmatprep.mubr.bf16.mxu0 %v1722
        %1787 = vmatmul.mubr.bf16.gmra.mxu0 %v1706
        %v1788 = vpop.f32.mrf.mxu0
        %v1789 = vadd.f32 %v1669, %v1788
        %v1790 = vpop.f32.mrf.mxu0
        %v1791 = vadd.f32 %v1669, %v1790
        %v1792 = vpop.f32.mrf.mxu0
        %v1793 = vadd.f32 %v1674, %v1792
        %v1794 = vpop.f32.mrf.mxu0
        %v1795 = vadd.f32 %v1674, %v1794
        %1796 = vdwg.mxu0
        %v1797 = vtanh.pop %v1759
        %v1798 = vtanh.pop %v1761
        %v1799 = vtanh.pop %v1763
        %v1800 = vtanh.pop %v1765
        %v1801 = vtanh.pop %v1769
        %v1802 = vtanh.pop %v1771
        %v1803 = vtanh.pop %v1773
        %v1804 = vtanh.pop %v1775
        %v1805 = vxor.u32 %v1779, 2147483648
        %v1806 = vxor.u32 %v1781, 2147483648
        %v1807 = vxor.u32 %v1783, 2147483648
        %v1808 = vxor.u32 %v1785, 2147483648
        %v1809 = vxor.u32 %v1789, 2147483648
        %v1810 = vxor.u32 %v1791, 2147483648
        %v1811 = vxor.u32 %v1793, 2147483648
        %v1812 = vxor.u32 %v1795, 2147483648
        %v1813 = vmul.f32 %v1805, 1.442695
        %v1814 = vpow.pop %v1813
        %v1815 = vmul.f32 %v1806, 1.442695
        %v1816 = vpow.pop %v1815
        %v1817 = vmul.f32 %v1807, 1.442695
        %v1818 = vpow.pop %v1817
        %v1819 = vmul.f32 %v1808, 1.442695
        %v1820 = vpow.pop %v1819
        %v1821 = vmul.f32 %v1809, 1.442695
        %v1822 = vpow.pop %v1821
        %v1823 = vmul.f32 %v1810, 1.442695
        %v1824 = vpow.pop %v1823
        %v1825 = vmul.f32 %v1811, 1.442695
        %v1826 = vpow.pop %v1825
        %v1827 = vmul.f32 %v1812, 1.442695
        %v1828 = vpow.pop %v1827
        %v1829 = vadd.f32 %v1814, 1.0
        %v1830 = vadd.f32 %v1816, 1.0
        %v1831 = vadd.f32 %v1818, 1.0
        %v1832 = vadd.f32 %v1820, 1.0
        %v1833 = vadd.f32 %v1822, 1.0
        %v1834 = vadd.f32 %v1824, 1.0
        %v1835 = vadd.f32 %v1826, 1.0
        %v1836 = vadd.f32 %v1828, 1.0
        %v1837 = vrcp.pop %v1829
        %v1838 = vmul.f32 1.0, %v1837
        %v1839 = vrcp.pop %v1830
        %v1840 = vmul.f32 1.0, %v1839
        %v1841 = vrcp.pop %v1831
        %v1842 = vmul.f32 1.0, %v1841
        %v1843 = vrcp.pop %v1832
        %v1844 = vmul.f32 1.0, %v1843
        %v1845 = vrcp.pop %v1833
        %v1846 = vmul.f32 1.0, %v1845
        %v1847 = vrcp.pop %v1834
        %v1848 = vmul.f32 1.0, %v1847
        %v1849 = vrcp.pop %v1835
        %v1850 = vmul.f32 1.0, %v1849
        %v1851 = vrcp.pop %v1836
        %v1852 = vmul.f32 1.0, %v1851
        %v1853 = vmul.f32 %v1797, %v1838
        %v1854 = vmul.f32 %v1798, %v1840
        %v1855 = vmul.f32 %v1799, %v1842
        %v1856 = vmul.f32 %v1800, %v1844
        %v1857 = vmul.f32 %v1801, %v1846
        %v1858 = vmul.f32 %v1802, %v1848
        %v1859 = vmul.f32 %v1803, %v1850
        %v1860 = vmul.f32 %v1804, %v1852
        %s1861 = scalar_lea.vmem %s550, 32 [#allocation7]
        %v1862 = vld [vmem:[%s1861] sm:$0xf]
        %v1863 = vld [vmem:[%s1861 + $0x4] sm:$0xf]
        %v1864 = vld [vmem:[%s1861 + $0x8] sm:$0xf]
        %v1865 = vld [vmem:[%s1861 + $0xc] sm:$0xf]
        %v1866 = vld [vmem:[%s1861 + $0x10] sm:$0xf]
        %v1867 = vld [vmem:[%s1861 + $0x14] sm:$0xf]
        %v1868 = vld [vmem:[%s1861 + $0x18] sm:$0xf]
        %v1869 = vld [vmem:[%s1861 + $0x1c] sm:$0xf]
        %v1870 = vpack.c.bf16 %v1855, %v1853
        %v1871 = vpack.c.bf16 %v1856, %v1854
        %v1872 = vpack.c.bf16 %v1859, %v1857
        %v1873 = vpack.c.bf16 %v1860, %v1858
        %s1874 = scalar_lea.vmem %s559, 64 [#allocation8]
        %v1875 = vld [vmem:[%s1874] sm:$0xff]
        %v1876 = vld [vmem:[%s1874 + $0x8] sm:$0xff]
        %v1877 = vld [vmem:[%s1874 + $0x10] sm:$0xff]
        %v1878 = vld [vmem:[%s1874 + $0x18] sm:$0xff]
        %v1879 = vld [vmem:[%s1874 + $0x20] sm:$0xff]
        %v1880 = vld [vmem:[%s1874 + $0x28] sm:$0xff]
        %v1881 = vld [vmem:[%s1874 + $0x30] sm:$0xff]
        %v1882 = vld [vmem:[%s1874 + $0x38] sm:$0xff]
        %1884 = vset.pattern.permute.xlu0 0
        %1885 = vperm.xlu0 %1884, %v1875
        %v1886 = vpop.permute.xlu0 %1885
        %1889 = vset.pattern.permute.xlu0 0
        %1890 = vperm.xlu0 %1889, %v1876
        %v1891 = vpop.permute.xlu0 %1890
        %1894 = vset.pattern.permute.xlu0 0
        %1895 = vperm.xlu0 %1894, %v1877
        %v1896 = vpop.permute.xlu0 %1895
        %1899 = vset.pattern.permute.xlu0 0
        %1900 = vperm.xlu0 %1899, %v1878
        %v1901 = vpop.permute.xlu0 %1900
        %1904 = vset.pattern.permute.xlu0 0
        %1905 = vperm.xlu0 %1904, %v1879
        %v1906 = vpop.permute.xlu0 %1905
        %1909 = vset.pattern.permute.xlu0 0
        %1910 = vperm.xlu0 %1909, %v1880
        %v1911 = vpop.permute.xlu0 %1910
        %1914 = vset.pattern.permute.xlu0 0
        %1915 = vperm.xlu0 %1914, %v1881
        %v1916 = vpop.permute.xlu0 %1915
        %1919 = vset.pattern.permute.xlu0 0
        %1920 = vperm.xlu0 %1919, %v1882
        %v1921 = vpop.permute.xlu0 %1920
        %v1931 = vunpack.c.l.b16 %v1862
        %v1932 = vunpack.c.l.b16 %v1863
        %v1933 = vunpack.c.l.b16 %v1864
        %v1934 = vunpack.c.l.b16 %v1865
        %v1935 = vunpack.c.l.b16 %v1866
        %v1936 = vunpack.c.l.b16 %v1867
        %v1937 = vunpack.c.l.b16 %v1868
        %v1938 = vunpack.c.l.b16 %v1869
        %v1939 = vpack.c.b16 %v1932, %v1931
        %v1940 = vpack.c.b16 %v1934, %v1933
        %v1941 = vpack.c.b16 %v1936, %v1935
        %v1942 = vpack.c.b16 %v1938, %v1937
        %v1944 = vsel %vm1163, %v1939, 0
        %v1947 = vsel %vm1163, %v1940, 0
        %v1950 = vsel %vm1163, %v1941, 0
        %v1953 = vsel %vm1163, %v1942, 0
        %1955 = vmatprep.subr.bf16.mxu0 0
        %1956 = vmatpush1.bf16.msra.mxu0 0
        %1957 = vmatprep.subr.bf16.mxu0 0
        %1958 = vmatpush1.bf16.msra.mxu0 0
        %1959 = vmatprep.subr.bf16.mxu0 0
        %1960 = vmatpush1.bf16.msra.mxu0 0
        %1961 = vmatprep.subr.bf16.mxu0 0
        %1962 = vmatpush1.bf16.msra.mxu0 0
        %1963 = vmatprep.subr.bf16.mxu0 0
        %1964 = vmatpush1.bf16.msra.mxu0 0
        %1965 = vmatprep.subr.bf16.mxu0 0
        %1966 = vmatpush1.bf16.msra.mxu0 0
        %1967 = vmatprep.subr.bf16.mxu0 %v1873
        %1968 = vmatpush1.bf16.msra.mxu0 %v1872
        %1969 = vmatprep.subr.bf16.mxu0 %v1871
        %1970 = vmatpush1.bf16.msra.mxu0 %v1870
        %1971 = vmatprep.subr.bf16.mxu0 0
        %1972 = vmatpush2.bf16.msra.mxu0 0
        %1973 = vmatprep.subr.bf16.mxu0 0
        %1974 = vmatpush2.bf16.msra.mxu0 0
        %1975 = vmatprep.subr.bf16.mxu0 0
        %1976 = vmatpush2.bf16.msra.mxu0 0
        %1977 = vmatprep.subr.bf16.mxu0 0
        %1978 = vmatpush2.bf16.msra.mxu0 0
        %1979 = vmatprep.subr.bf16.mxu0 0
        %1980 = vmatpush2.bf16.msra.mxu0 0
        %1981 = vmatprep.subr.bf16.mxu0 0
        %1982 = vmatpush2.bf16.msra.mxu0 0
        %1983 = vmatprep.subr.bf16.mxu0 0
        %1984 = vmatpush2.bf16.msra.mxu0 0
        %1985 = vmatprep.subr.bf16.mxu0 0
        %1986 = vmatpush2.bf16.msra.mxu0 0
        %1987 = vmatprep.mubr.bf16.mxu0 0
        %1988 = vmatmul.mubr.bf16.gmra.mxu0 %v1944
        %v1989 = vpop.f32.mrf.mxu0
        %v1990 = vadd.f32 %v1886, %v1989
        %v1991 = vpop.f32.mrf.mxu0
        %v1992 = vadd.f32 %v1886, %v1991
        %v1993 = vpop.f32.mrf.mxu0
        %v1994 = vadd.f32 %v1891, %v1993
        %v1995 = vpop.f32.mrf.mxu0
        %v1996 = vadd.f32 %v1891, %v1995
        %1997 = vmatprep.mubr.bf16.mxu0 0
        %1998 = vmatmul.mubr.bf16.gmra.mxu0 %v1947
        %v1999 = vpop.f32.mrf.mxu0
        %v2000 = vadd.f32 %v1896, %v1999
        %v2001 = vpop.f32.mrf.mxu0
        %v2002 = vadd.f32 %v1896, %v2001
        %v2003 = vpop.f32.mrf.mxu0
        %v2004 = vadd.f32 %v1901, %v2003
        %v2005 = vpop.f32.mrf.mxu0
        %v2006 = vadd.f32 %v1901, %v2005
        %2007 = vmatprep.mubr.bf16.mxu0 0
        %2008 = vmatmul.mubr.bf16.gmra.mxu0 %v1950
        %v2009 = vpop.f32.mrf.mxu0
        %v2010 = vadd.f32 %v1906, %v2009
        %v2011 = vpop.f32.mrf.mxu0
        %v2012 = vadd.f32 %v1906, %v2011
        %v2013 = vpop.f32.mrf.mxu0
        %v2014 = vadd.f32 %v1911, %v2013
        %v2015 = vpop.f32.mrf.mxu0
        %v2016 = vadd.f32 %v1911, %v2015
        %2017 = vmatprep.mubr.bf16.mxu0 0
        %2018 = vmatmul.mubr.bf16.gmra.mxu0 %v1953
        %v2019 = vpop.f32.mrf.mxu0
        %v2020 = vadd.f32 %v1916, %v2019
        %v2021 = vpop.f32.mrf.mxu0
        %v2022 = vadd.f32 %v1916, %v2021
        %v2023 = vpop.f32.mrf.mxu0
        %v2024 = vadd.f32 %v1921, %v2023
        %v2025 = vpop.f32.mrf.mxu0
        %v2026 = vadd.f32 %v1921, %v2025
        %2027 = vdwg.mxu0
        %v2028 = vadd.f32 %v1486, %v1990
        %v2029 = vadd.f32 %v1487, %v1992
        %v2030 = vadd.f32 %v1488, %v1994
        %v2031 = vadd.f32 %v1489, %v1996
        %v2032 = vadd.f32 %v1490, %v2000
        %v2033 = vadd.f32 %v1491, %v2002
        %v2034 = vadd.f32 %v1492, %v2004
        %v2035 = vadd.f32 %v1493, %v2006
        %v2036 = vmul.f32 %v2028, %v934
        %v2037 = vmul.f32 %v2029, %v938
        %v2038 = vmul.f32 %v2030, %v934
        %v2039 = vmul.f32 %v2031, %v938
        %v2040 = vmul.f32 %v2032, %v934
        %v2041 = vmul.f32 %v2033, %v938
        %v2042 = vmul.f32 %v2034, %v934
        %v2043 = vmul.f32 %v2035, %v938
        %v2044 = vadd.f32 %v1494, %v2010
        %v2045 = vadd.f32 %v1495, %v2012
        %v2046 = vadd.f32 %v1496, %v2014
        %v2047 = vadd.f32 %v1497, %v2016
        %v2048 = vadd.f32 %v1498, %v2020
        %v2049 = vadd.f32 %v1499, %v2022
        %v2050 = vadd.f32 %v1500, %v2024
        %v2051 = vadd.f32 %v1501, %v2026
        %2052 = vrot.lane.b32.xlu0 %v2036, 2
        %v2053 = vpop.permute.xlu0 %2052
        %2054 = vrot.lane.b32.xlu0 %v2038, 2
        %v2055 = vpop.permute.xlu0 %2054
        %2056 = vrot.lane.b32.xlu0 %v2040, 2
        %v2057 = vpop.permute.xlu0 %2056
        %2058 = vrot.lane.b32.xlu0 %v2042, 2
        %v2059 = vpop.permute.xlu0 %2058
        %2060 = vrot.lane.b32.xlu0 %v2037, 2
        %v2061 = vpop.permute.xlu0 %2060
        %2062 = vrot.lane.b32.xlu0 %v2039, 2
        %v2063 = vpop.permute.xlu0 %2062
        %2064 = vrot.lane.b32.xlu0 %v2041, 2
        %v2065 = vpop.permute.xlu0 %2064
        %2066 = vrot.lane.b32.xlu0 %v2043, 2
        %v2067 = vpop.permute.xlu0 %2066
        %v2068 = vsel %vm967, %v2053, %v2061
        %v2069 = vsel %vm967, %v2055, %v2063
        %v2070 = vsel %vm967, %v2057, %v2065
        %v2071 = vsel %vm967, %v2059, %v2067
        %v2072 = vsel %vm967, %v2061, %v2053
        %v2073 = vsel %vm967, %v2063, %v2055
        %v2074 = vsel %vm967, %v2065, %v2057
        %v2075 = vsel %vm967, %v2067, %v2059
        %v2076 = vpack.c.bf16 %v2073, %v2072
        %v2077 = vpack.c.bf16 %v2069, %v2068
        %v2078 = vpack.c.bf16 %v2075, %v2074
        %v2079 = vpack.c.bf16 %v2071, %v2070
        %2080 = vrot.lane.b32.xlu0 %v2036, 1
        %v2081 = vpop.permute.xlu0 %2080
        %2082 = vrot.lane.b32.xlu0 %v2038, 1
        %v2083 = vpop.permute.xlu0 %2082
        %2084 = vrot.lane.b32.xlu0 %v2040, 1
        %v2085 = vpop.permute.xlu0 %2084
        %2086 = vrot.lane.b32.xlu0 %v2042, 1
        %v2087 = vpop.permute.xlu0 %2086
        %2088 = vrot.lane.b32.xlu0 %v2037, 1
        %v2089 = vpop.permute.xlu0 %2088
        %2090 = vrot.lane.b32.xlu0 %v2039, 1
        %v2091 = vpop.permute.xlu0 %2090
        %2092 = vrot.lane.b32.xlu0 %v2041, 1
        %v2093 = vpop.permute.xlu0 %2092
        %2094 = vrot.lane.b32.xlu0 %v2043, 1
        %v2095 = vpop.permute.xlu0 %2094
        %v2096 = vsel %vm996, %v2081, %v2089
        %v2097 = vsel %vm996, %v2083, %v2091
        %v2098 = vsel %vm996, %v2085, %v2093
        %v2099 = vsel %vm996, %v2087, %v2095
        %v2100 = vsel %vm996, %v2089, %v2081
        %v2101 = vsel %vm996, %v2091, %v2083
        %v2102 = vsel %vm996, %v2093, %v2085
        %v2103 = vsel %vm996, %v2095, %v2087
        %v2104 = vpack.c.bf16 %v2101, %v2100
        %v2105 = vpack.c.bf16 %v2097, %v2096
        %v2106 = vpack.c.bf16 %v2103, %v2102
        %v2107 = vpack.c.bf16 %v2099, %v2098
        %v2108 = vpack.c.bf16 %v2038, %v2036
        %v2109 = vpack.c.bf16 %v2039, %v2037
        %v2110 = vpack.c.bf16 %v2042, %v2040
        %v2111 = vpack.c.bf16 %v2043, %v2041
        %2112 = vrot.lane.b32.xlu0 %v2036, 127
        %v2113 = vpop.permute.xlu0 %2112
        %2114 = vrot.lane.b32.xlu0 %v2038, 127
        %v2115 = vpop.permute.xlu0 %2114
        %2116 = vrot.lane.b32.xlu0 %v2040, 127
        %v2117 = vpop.permute.xlu0 %2116
        %2118 = vrot.lane.b32.xlu0 %v2042, 127
        %v2119 = vpop.permute.xlu0 %2118
        %2120 = vrot.lane.b32.xlu0 %v2037, 127
        %v2121 = vpop.permute.xlu0 %2120
        %2122 = vrot.lane.b32.xlu0 %v2039, 127
        %v2123 = vpop.permute.xlu0 %2122
        %2124 = vrot.lane.b32.xlu0 %v2041, 127
        %v2125 = vpop.permute.xlu0 %2124
        %2126 = vrot.lane.b32.xlu0 %v2043, 127
        %v2127 = vpop.permute.xlu0 %2126
        %v2128 = vsel %vm1029, %v2113, %v2121
        %v2129 = vsel %vm1029, %v2115, %v2123
        %v2130 = vsel %vm1029, %v2117, %v2125
        %v2131 = vsel %vm1029, %v2119, %v2127
        %v2132 = vsel %vm1029, %v2121, %v2113
        %v2133 = vsel %vm1029, %v2123, %v2115
        %v2134 = vsel %vm1029, %v2125, %v2117
        %v2135 = vsel %vm1029, %v2127, %v2119
        %v2136 = vpack.c.bf16 %v2129, %v2128
        %v2137 = vpack.c.bf16 %v2133, %v2132
        %v2138 = vpack.c.bf16 %v2131, %v2130
        %v2139 = vpack.c.bf16 %v2135, %v2134
        %2140 = vrot.lane.b32.xlu0 %v2036, 126
        %v2141 = vpop.permute.xlu0 %2140
        %2142 = vrot.lane.b32.xlu0 %v2038, 126
        %v2143 = vpop.permute.xlu0 %2142
        %2144 = vrot.lane.b32.xlu0 %v2040, 126
        %v2145 = vpop.permute.xlu0 %2144
        %2146 = vrot.lane.b32.xlu0 %v2042, 126
        %v2147 = vpop.permute.xlu0 %2146
        %2148 = vrot.lane.b32.xlu0 %v2037, 126
        %v2149 = vpop.permute.xlu0 %2148
        %2150 = vrot.lane.b32.xlu0 %v2039, 126
        %v2151 = vpop.permute.xlu0 %2150
        %2152 = vrot.lane.b32.xlu0 %v2041, 126
        %v2153 = vpop.permute.xlu0 %2152
        %2154 = vrot.lane.b32.xlu0 %v2043, 126
        %v2155 = vpop.permute.xlu0 %2154
        %v2156 = vsel %vm1058, %v2141, %v2149
        %v2157 = vsel %vm1058, %v2143, %v2151
        %v2158 = vsel %vm1058, %v2145, %v2153
        %v2159 = vsel %vm1058, %v2147, %v2155
        %v2160 = vsel %vm1058, %v2149, %v2141
        %v2161 = vsel %vm1058, %v2151, %v2143
        %v2162 = vsel %vm1058, %v2153, %v2145
        %v2163 = vsel %vm1058, %v2155, %v2147
        %v2164 = vpack.c.bf16 %v2157, %v2156
        %v2165 = vpack.c.bf16 %v2161, %v2160
        %v2166 = vpack.c.bf16 %v2159, %v2158
        %v2167 = vpack.c.bf16 %v2163, %v2162
        %s2168 = scalar_lea.vmem %s532, 128 [#allocation2]
        %v2169 = vld [vmem:[%s2168] sm:$0xff]
        %v2170 = vld [vmem:[%s2168 + $0x8] sm:$0xff]
        %v2171 = vld [vmem:[%s2168 + $0x10] sm:$0xff]
        %v2172 = vld [vmem:[%s2168 + $0x18] sm:$0xff]
        %v2173 = vld [vmem:[%s2168 + $0x20] sm:$0xff]
        %v2174 = vld [vmem:[%s2168 + $0x28] sm:$0xff]
        %v2175 = vld [vmem:[%s2168 + $0x30] sm:$0xff]
        %v2176 = vld [vmem:[%s2168 + $0x38] sm:$0xff]
        %s2177 = scalar_lea.vmem %s541, 128 [#allocation5]
        %v2178 = vld [vmem:[%s2177] sm:$0xff]
        %v2179 = vld [vmem:[%s2177 + $0x8] sm:$0xff]
        %v2180 = vld [vmem:[%s2177 + $0x10] sm:$0xff]
        %v2181 = vld [vmem:[%s2177 + $0x18] sm:$0xff]
        %v2182 = vld [vmem:[%s2177 + $0x20] sm:$0xff]
        %v2183 = vld [vmem:[%s2177 + $0x28] sm:$0xff]
        %v2184 = vld [vmem:[%s2177 + $0x30] sm:$0xff]
        %v2185 = vld [vmem:[%s2177 + $0x38] sm:$0xff]
        %2187 = vset.pattern.permute.xlu0 0
        %2188 = vperm.xlu0 %2187, %v2178
        %v2189 = vpop.permute.xlu0 %2188
        %2192 = vset.pattern.permute.xlu0 0
        %2193 = vperm.xlu0 %2192, %v2179
        %v2194 = vpop.permute.xlu0 %2193
        %2197 = vset.pattern.permute.xlu0 0
        %2198 = vperm.xlu0 %2197, %v2180
        %v2199 = vpop.permute.xlu0 %2198
        %2202 = vset.pattern.permute.xlu0 0
        %2203 = vperm.xlu0 %2202, %v2181
        %v2204 = vpop.permute.xlu0 %2203
        %2207 = vset.pattern.permute.xlu0 0
        %2208 = vperm.xlu0 %2207, %v2182
        %v2209 = vpop.permute.xlu0 %2208
        %2212 = vset.pattern.permute.xlu0 0
        %2213 = vperm.xlu0 %2212, %v2183
        %v2214 = vpop.permute.xlu0 %2213
        %2217 = vset.pattern.permute.xlu0 0
        %2218 = vperm.xlu0 %2217, %v2184
        %v2219 = vpop.permute.xlu0 %2218
        %2222 = vset.pattern.permute.xlu0 0
        %2223 = vperm.xlu0 %2222, %v2185
        %v2224 = vpop.permute.xlu0 %2223
        %v2234 = vunpack.c.l.b16 %v2169
        %v2235 = vunpack.c.h.b16 %v2169
        %v2236 = vunpack.c.l.b16 %v2170
        %v2237 = vunpack.c.h.b16 %v2170
        %v2238 = vunpack.c.l.b16 %v2171
        %v2239 = vunpack.c.h.b16 %v2171
        %v2240 = vunpack.c.l.b16 %v2172
        %v2241 = vunpack.c.h.b16 %v2172
        %v2242 = vunpack.c.l.b16 %v2173
        %v2243 = vunpack.c.h.b16 %v2173
        %v2244 = vunpack.c.l.b16 %v2174
        %v2245 = vunpack.c.h.b16 %v2174
        %v2246 = vunpack.c.l.b16 %v2175
        %v2247 = vunpack.c.h.b16 %v2175
        %v2248 = vunpack.c.l.b16 %v2176
        %v2249 = vunpack.c.h.b16 %v2176
        %v2250 = vpack.c.b16 %v2236, %v2234
        %v2251 = vpack.c.b16 %v2237, %v2235
        %v2252 = vpack.c.b16 %v2240, %v2238
        %v2253 = vpack.c.b16 %v2241, %v2239
        %v2254 = vpack.c.b16 %v2244, %v2242
        %v2255 = vpack.c.b16 %v2245, %v2243
        %v2256 = vpack.c.b16 %v2248, %v2246
        %v2257 = vpack.c.b16 %v2249, %v2247
        %v2263 = vsel %vm1163, %v2251, 0
        %v2266 = vsel %vm1163, %v2253, 0
        %v2269 = vsel %vm1163, %v2255, 0
        %v2272 = vsel %vm1163, %v2257, 0
        %2274 = vmatprep.subr.bf16.mxu0 %v2139
        %2275 = vmatpush1.bf16.msra.mxu0 %v2138
        %2276 = vmatprep.subr.bf16.mxu0 %v2137
        %2277 = vmatpush1.bf16.msra.mxu0 %v2136
        %2278 = vmatprep.subr.bf16.mxu0 %v2111
        %2279 = vmatpush1.bf16.msra.mxu0 %v2110
        %2280 = vmatprep.subr.bf16.mxu0 %v2109
        %2281 = vmatpush1.bf16.msra.mxu0 %v2108
        %2282 = vmatprep.subr.bf16.mxu0 %v2107
        %2283 = vmatpush1.bf16.msra.mxu0 %v2106
        %2284 = vmatprep.subr.bf16.mxu0 %v2105
        %2285 = vmatpush1.bf16.msra.mxu0 %v2104
        %2286 = vmatprep.subr.bf16.mxu0 %v2079
        %2287 = vmatpush1.bf16.msra.mxu0 %v2078
        %2288 = vmatprep.subr.bf16.mxu0 %v2077
        %2289 = vmatpush1.bf16.msra.mxu0 %v2076
        %2290 = vmatprep.subr.bf16.mxu0 0
        %2291 = vmatpush2.bf16.msra.mxu0 0
        %2292 = vmatprep.subr.bf16.mxu0 0
        %2293 = vmatpush2.bf16.msra.mxu0 0
        %2294 = vmatprep.subr.bf16.mxu0 0
        %2295 = vmatpush2.bf16.msra.mxu0 0
        %2296 = vmatprep.subr.bf16.mxu0 0
        %2297 = vmatpush2.bf16.msra.mxu0 0
        %2298 = vmatprep.subr.bf16.mxu0 0
        %2299 = vmatpush2.bf16.msra.mxu0 0
        %2300 = vmatprep.subr.bf16.mxu0 0
        %2301 = vmatpush2.bf16.msra.mxu0 0
        %2302 = vmatprep.subr.bf16.mxu0 %v2167
        %2303 = vmatpush2.bf16.msra.mxu0 %v2166
        %2304 = vmatprep.subr.bf16.mxu0 %v2165
        %2305 = vmatpush2.bf16.msra.mxu0 %v2164
        %2306 = vmatprep.mubr.bf16.mxu0 %v2263
        %2307 = vmatmul.mubr.bf16.gmra.mxu0 %v2250
        %v2308 = vpop.f32.mrf.mxu0
        %v2309 = vadd.f32 %v2189, %v2308
        %v2310 = vpop.f32.mrf.mxu0
        %v2311 = vadd.f32 %v2189, %v2310
        %v2312 = vpop.f32.mrf.mxu0
        %v2313 = vadd.f32 %v2194, %v2312
        %v2314 = vpop.f32.mrf.mxu0
        %v2315 = vadd.f32 %v2194, %v2314
        %2316 = vmatprep.mubr.bf16.mxu0 %v2266
        %2317 = vmatmul.mubr.bf16.gmra.mxu0 %v2252
        %v2318 = vpop.f32.mrf.mxu0
        %v2319 = vadd.f32 %v2199, %v2318
        %v2320 = vpop.f32.mrf.mxu0
        %v2321 = vadd.f32 %v2199, %v2320
        %v2322 = vpop.f32.mrf.mxu0
        %v2323 = vadd.f32 %v2204, %v2322
        %v2324 = vpop.f32.mrf.mxu0
        %v2325 = vadd.f32 %v2204, %v2324
        %2326 = vmatprep.mubr.bf16.mxu0 %v2269
        %2327 = vmatmul.mubr.bf16.gmra.mxu0 %v2254
        %v2328 = vpop.f32.mrf.mxu0
        %v2329 = vadd.f32 %v2209, %v2328
        %v2330 = vpop.f32.mrf.mxu0
        %v2331 = vadd.f32 %v2209, %v2330
        %v2332 = vpop.f32.mrf.mxu0
        %v2333 = vadd.f32 %v2214, %v2332
        %v2334 = vpop.f32.mrf.mxu0
        %v2335 = vadd.f32 %v2214, %v2334
        %2336 = vmatprep.mubr.bf16.mxu0 %v2272
        %2337 = vmatmul.mubr.bf16.gmra.mxu0 %v2256
        %v2338 = vpop.f32.mrf.mxu0
        %v2339 = vadd.f32 %v2219, %v2338
        %v2340 = vpop.f32.mrf.mxu0
        %v2341 = vadd.f32 %v2219, %v2340
        %v2342 = vpop.f32.mrf.mxu0
        %v2343 = vadd.f32 %v2224, %v2342
        %v2344 = vpop.f32.mrf.mxu0
        %v2345 = vadd.f32 %v2224, %v2344
        %2346 = vdwg.mxu0
        %v2347 = vtanh.pop %v2309
        %v2348 = vtanh.pop %v2311
        %v2349 = vtanh.pop %v2313
        %v2350 = vtanh.pop %v2315
        %v2351 = vtanh.pop %v2319
        %v2352 = vtanh.pop %v2321
        %v2353 = vtanh.pop %v2323
        %v2354 = vtanh.pop %v2325
        %v2355 = vxor.u32 %v2329, 2147483648
        %v2356 = vxor.u32 %v2331, 2147483648
        %v2357 = vxor.u32 %v2333, 2147483648
        %v2358 = vxor.u32 %v2335, 2147483648
        %v2359 = vxor.u32 %v2339, 2147483648
        %v2360 = vxor.u32 %v2341, 2147483648
        %v2361 = vxor.u32 %v2343, 2147483648
        %v2362 = vxor.u32 %v2345, 2147483648
        %v2363 = vmul.f32 %v2355, 1.442695
        %v2364 = vpow.pop %v2363
        %v2365 = vmul.f32 %v2356, 1.442695
        %v2366 = vpow.pop %v2365
        %v2367 = vmul.f32 %v2357, 1.442695
        %v2368 = vpow.pop %v2367
        %v2369 = vmul.f32 %v2358, 1.442695
        %v2370 = vpow.pop %v2369
        %v2371 = vmul.f32 %v2359, 1.442695
        %v2372 = vpow.pop %v2371
        %v2373 = vmul.f32 %v2360, 1.442695
        %v2374 = vpow.pop %v2373
        %v2375 = vmul.f32 %v2361, 1.442695
        %v2376 = vpow.pop %v2375
        %v2377 = vmul.f32 %v2362, 1.442695
        %v2378 = vpow.pop %v2377
        %v2379 = vadd.f32 %v2364, 1.0
        %v2380 = vadd.f32 %v2366, 1.0
        %v2381 = vadd.f32 %v2368, 1.0
        %v2382 = vadd.f32 %v2370, 1.0
        %v2383 = vadd.f32 %v2372, 1.0
        %v2384 = vadd.f32 %v2374, 1.0
        %v2385 = vadd.f32 %v2376, 1.0
        %v2386 = vadd.f32 %v2378, 1.0
        %v2387 = vrcp.pop %v2379
        %v2388 = vmul.f32 1.0, %v2387
        %v2389 = vrcp.pop %v2380
        %v2390 = vmul.f32 1.0, %v2389
        %v2391 = vrcp.pop %v2381
        %v2392 = vmul.f32 1.0, %v2391
        %v2393 = vrcp.pop %v2382
        %v2394 = vmul.f32 1.0, %v2393
        %v2395 = vrcp.pop %v2383
        %v2396 = vmul.f32 1.0, %v2395
        %v2397 = vrcp.pop %v2384
        %v2398 = vmul.f32 1.0, %v2397
        %v2399 = vrcp.pop %v2385
        %v2400 = vmul.f32 1.0, %v2399
        %v2401 = vrcp.pop %v2386
        %v2402 = vmul.f32 1.0, %v2401
        %v2403 = vmul.f32 %v2347, %v2388
        %v2404 = vmul.f32 %v2348, %v2390
        %v2405 = vmul.f32 %v2349, %v2392
        %v2406 = vmul.f32 %v2350, %v2394
        %v2407 = vmul.f32 %v2351, %v2396
        %v2408 = vmul.f32 %v2352, %v2398
        %v2409 = vmul.f32 %v2353, %v2400
        %v2410 = vmul.f32 %v2354, %v2402
        %s2411 = scalar_lea.vmem %s550, 64 [#allocation7]
        %v2412 = vld [vmem:[%s2411] sm:$0xf]
        %v2413 = vld [vmem:[%s2411 + $0x4] sm:$0xf]
        %v2414 = vld [vmem:[%s2411 + $0x8] sm:$0xf]
        %v2415 = vld [vmem:[%s2411 + $0xc] sm:$0xf]
        %v2416 = vld [vmem:[%s2411 + $0x10] sm:$0xf]
        %v2417 = vld [vmem:[%s2411 + $0x14] sm:$0xf]
        %v2418 = vld [vmem:[%s2411 + $0x18] sm:$0xf]
        %v2419 = vld [vmem:[%s2411 + $0x1c] sm:$0xf]
        %v2420 = vpack.c.bf16 %v2405, %v2403
        %v2421 = vpack.c.bf16 %v2406, %v2404
        %v2422 = vpack.c.bf16 %v2409, %v2407
        %v2423 = vpack.c.bf16 %v2410, %v2408
        %s2424 = scalar_lea.vmem %s559, 128 [#allocation8]
        %v2425 = vld [vmem:[%s2424] sm:$0xff]
        %v2426 = vld [vmem:[%s2424 + $0x8] sm:$0xff]
        %v2427 = vld [vmem:[%s2424 + $0x10] sm:$0xff]
        %v2428 = vld [vmem:[%s2424 + $0x18] sm:$0xff]
        %v2429 = vld [vmem:[%s2424 + $0x20] sm:$0xff]
        %v2430 = vld [vmem:[%s2424 + $0x28] sm:$0xff]
        %v2431 = vld [vmem:[%s2424 + $0x30] sm:$0xff]
        %v2432 = vld [vmem:[%s2424 + $0x38] sm:$0xff]
        %2434 = vset.pattern.permute.xlu0 0
        %2435 = vperm.xlu0 %2434, %v2425
        %v2436 = vpop.permute.xlu0 %2435
        %2438 = vset.pattern.permute.xlu0 0
        %2439 = vperm.xlu0 %2438, %v2426
        %v2440 = vpop.permute.xlu0 %2439
        %2442 = vset.pattern.permute.xlu0 0
        %2443 = vperm.xlu0 %2442, %v2427
        %v2444 = vpop.permute.xlu0 %2443
        %2446 = vset.pattern.permute.xlu0 0
        %2447 = vperm.xlu0 %2446, %v2428
        %v2448 = vpop.permute.xlu0 %2447
        %2450 = vset.pattern.permute.xlu0 0
        %2451 = vperm.xlu0 %2450, %v2429
        %v2452 = vpop.permute.xlu0 %2451
        %2455 = vset.pattern.permute.xlu0 0
        %2456 = vperm.xlu0 %2455, %v2430
        %v2457 = vpop.permute.xlu0 %2456
        %2460 = vset.pattern.permute.xlu0 0
        %2461 = vperm.xlu0 %2460, %v2431
        %v2462 = vpop.permute.xlu0 %2461
        %2465 = vset.pattern.permute.xlu0 0
        %2466 = vperm.xlu0 %2465, %v2432
        %v2467 = vpop.permute.xlu0 %2466
        %v2477 = vunpack.c.l.b16 %v2412
        %v2478 = vunpack.c.l.b16 %v2413
        %v2479 = vunpack.c.l.b16 %v2414
        %v2480 = vunpack.c.l.b16 %v2415
        %v2481 = vunpack.c.l.b16 %v2416
        %v2482 = vunpack.c.l.b16 %v2417
        %v2483 = vunpack.c.l.b16 %v2418
        %v2484 = vunpack.c.l.b16 %v2419
        %v2485 = vpack.c.b16 %v2478, %v2477
        %v2486 = vpack.c.b16 %v2480, %v2479
        %v2487 = vpack.c.b16 %v2482, %v2481
        %v2488 = vpack.c.b16 %v2484, %v2483
        %v2490 = vsel %vm1163, %v2485, 0
        %v2493 = vsel %vm1163, %v2486, 0
        %v2496 = vsel %vm1163, %v2487, 0
        %v2499 = vsel %vm1163, %v2488, 0
        %2501 = vmatprep.subr.bf16.mxu0 0
        %2502 = vmatpush1.bf16.msra.mxu0 0
        %2503 = vmatprep.subr.bf16.mxu0 0
        %2504 = vmatpush1.bf16.msra.mxu0 0
        %2505 = vmatprep.subr.bf16.mxu0 0
        %2506 = vmatpush1.bf16.msra.mxu0 0
        %2507 = vmatprep.subr.bf16.mxu0 0
        %2508 = vmatpush1.bf16.msra.mxu0 0
        %2509 = vmatprep.subr.bf16.mxu0 0
        %2510 = vmatpush1.bf16.msra.mxu0 0
        %2511 = vmatprep.subr.bf16.mxu0 0
        %2512 = vmatpush1.bf16.msra.mxu0 0
        %2513 = vmatprep.subr.bf16.mxu0 %v2423
        %2514 = vmatpush1.bf16.msra.mxu0 %v2422
        %2515 = vmatprep.subr.bf16.mxu0 %v2421
        %2516 = vmatpush1.bf16.msra.mxu0 %v2420
        %2517 = vmatprep.subr.bf16.mxu0 0
        %2518 = vmatpush2.bf16.msra.mxu0 0
        %2519 = vmatprep.subr.bf16.mxu0 0
        %2520 = vmatpush2.bf16.msra.mxu0 0
        %2521 = vmatprep.subr.bf16.mxu0 0
        %2522 = vmatpush2.bf16.msra.mxu0 0
        %2523 = vmatprep.subr.bf16.mxu0 0
        %2524 = vmatpush2.bf16.msra.mxu0 0
        %2525 = vmatprep.subr.bf16.mxu0 0
        %2526 = vmatpush2.bf16.msra.mxu0 0
        %2527 = vmatprep.subr.bf16.mxu0 0
        %2528 = vmatpush2.bf16.msra.mxu0 0
        %2529 = vmatprep.subr.bf16.mxu0 0
        %2530 = vmatpush2.bf16.msra.mxu0 0
        %2531 = vmatprep.subr.bf16.mxu0 0
        %2532 = vmatpush2.bf16.msra.mxu0 0
        %2533 = vmatprep.mubr.bf16.mxu0 0
        %2534 = vmatmul.mubr.bf16.gmra.mxu0 %v2490
        %v2535 = vpop.f32.mrf.mxu0
        %v2536 = vpop.f32.mrf.mxu0
        %v2537 = vpop.f32.mrf.mxu0
        %v2538 = vpop.f32.mrf.mxu0
        %2539 = vmatprep.mubr.bf16.mxu0 0
        %2540 = vmatmul.mubr.bf16.gmra.mxu0 %v2493
        %v2541 = vpop.f32.mrf.mxu0
        %v2542 = vpop.f32.mrf.mxu0
        %v2543 = vpop.f32.mrf.mxu0
        %v2544 = vpop.f32.mrf.mxu0
        %2545 = vmatprep.mubr.bf16.mxu0 0
        %2546 = vmatmul.mubr.bf16.gmra.mxu0 %v2496
        %v2547 = vpop.f32.mrf.mxu0
        %v2548 = vadd.f32 %v2452, %v2547
        %v2549 = vpop.f32.mrf.mxu0
        %v2550 = vadd.f32 %v2452, %v2549
        %v2551 = vpop.f32.mrf.mxu0
        %v2552 = vadd.f32 %v2457, %v2551
        %v2553 = vpop.f32.mrf.mxu0
        %v2554 = vadd.f32 %v2457, %v2553
        %2555 = vmatprep.mubr.bf16.mxu0 0
        %2556 = vmatmul.mubr.bf16.gmra.mxu0 %v2499
        %v2557 = vpop.f32.mrf.mxu0
        %v2558 = vadd.f32 %v2462, %v2557
        %v2559 = vpop.f32.mrf.mxu0
        %v2560 = vadd.f32 %v2462, %v2559
        %v2561 = vpop.f32.mrf.mxu0
        %v2562 = vadd.f32 %v2467, %v2561
        %v2563 = vpop.f32.mrf.mxu0
        %v2564 = vadd.f32 %v2467, %v2563
        %2565 = vdwg.mxu0
        %v2566 = vadd.f32 %v2044, %v2548
        %v2567 = vadd.f32 %v2045, %v2550
        %v2568 = vadd.f32 %v2046, %v2552
        %v2569 = vadd.f32 %v2047, %v2554
        %v2570 = vadd.f32 %v2048, %v2558
        %v2571 = vadd.f32 %v2049, %v2560
        %v2572 = vadd.f32 %v2050, %v2562
        %v2573 = vadd.f32 %v2051, %v2564
        %v2574 = vld [vmem:[%s678] sm:$0x3]
        %v2575 = vpack.c.bf16 %v2568, %v2566
        %v2576 = vpack.c.bf16 %v2569, %v2567
        %v2577 = vpack.c.bf16 %v2572, %v2570
        %v2578 = vpack.c.bf16 %v2573, %v2571
        %v2579 = vld [vmem:[%s568] sm:$0xf]
        %2581 = vset.pattern.permute.xlu0 0
        %2582 = vperm.xlu0 %2581, %v2579
        %v2583 = vpop.permute.xlu0 %2582
        %v2586 = vsel %vm1163, %v2574, 0
        %2588 = vmatprep.subr.bf16.mxu0 0
        %2589 = vmatpush1.bf16.msra.mxu0 0
        %2590 = vmatprep.subr.bf16.mxu0 0
        %2591 = vmatpush1.bf16.msra.mxu0 0
        %2592 = vmatprep.subr.bf16.mxu0 0
        %2593 = vmatpush1.bf16.msra.mxu0 0
        %2594 = vmatprep.subr.bf16.mxu0 0
        %2595 = vmatpush1.bf16.msra.mxu0 0
        %2596 = vmatprep.subr.bf16.mxu0 0
        %2597 = vmatpush1.bf16.msra.mxu0 0
        %2598 = vmatprep.subr.bf16.mxu0 0
        %2599 = vmatpush1.bf16.msra.mxu0 0
        %2600 = vmatprep.subr.bf16.mxu0 %v2578
        %2601 = vmatpush1.bf16.msra.mxu0 %v2577
        %2602 = vmatprep.subr.bf16.mxu0 %v2576
        %2603 = vmatpush1.bf16.msra.mxu0 %v2575
        %2604 = vmatprep.subr.bf16.mxu0 0
        %2605 = vmatpush2.bf16.msra.mxu0 0
        %2606 = vmatprep.subr.bf16.mxu0 0
        %2607 = vmatpush2.bf16.msra.mxu0 0
        %2608 = vmatprep.subr.bf16.mxu0 0
        %2609 = vmatpush2.bf16.msra.mxu0 0
        %2610 = vmatprep.subr.bf16.mxu0 0
        %2611 = vmatpush2.bf16.msra.mxu0 0
        %2612 = vmatprep.subr.bf16.mxu0 0
        %2613 = vmatpush2.bf16.msra.mxu0 0
        %2614 = vmatprep.subr.bf16.mxu0 0
        %2615 = vmatpush2.bf16.msra.mxu0 0
        %2616 = vmatprep.subr.bf16.mxu0 0
        %2617 = vmatpush2.bf16.msra.mxu0 0
        %2618 = vmatprep.subr.bf16.mxu0 0
        %2619 = vmatpush2.bf16.msra.mxu0 0
        %2620 = vmatprep.mubr.bf16.mxu0 0
        %2621 = vmatmul.mubr.bf16.gmra.mxu0 %v2586
        %v2622 = vpop.f32.mrf.mxu0
        %v2623 = vadd.f32 %v2583, %v2622
        %v2624 = vpop.f32.mrf.mxu0
        %v2625 = vadd.f32 %v2583, %v2624
        %v2626 = vpop.f32.mrf.mxu0
        %v2627 = vpop.f32.mrf.mxu0
        %2628 = vdwg.mxu0
        %v2629 = vmul.f32 %v2623, %v934
        %v2630 = vmul.f32 %v2625, %v938
        %v2631 = vld [vmem:[%s682] sm:$0xf]
        %v2632 = vsub.f32 1.0, %v692
        %2634 = vset.pattern.permute.xlu0 0
        %2635 = vperm.xlu0 %2634, %v2631
        %v2636 = vpop.permute.xlu0 %2635
        %v2639 = vlaneseq
        %v2640 = vshrl.u32 %v2639, 7
        %v2641 = vsub.s32 0, %v2640
        %v2642 = vrot.slane %v2632, %v2641
        %v2643 = vlaneseq
        %v2644 = vshrl.u32 %v2643, 7
        %v2645 = vsub.s32 1, %v2644
        %v2646 = vrot.slane %v2632, %v2645
        %v2649 = vmul.f32 %v2636, %v2642
        %v2650 = vmul.f32 %v2636, %v2646
        %v2651 = vsub.f32 1.0, %v2649
        %v2652 = vsub.f32 1.0, %v2650
        %v2655 = vcombine.low %v2651, %v2652
        %v2657 = vmul.f32 %v691, %v2655
        %v2660 = vcombine.low %v2629, %v2630
        %v2662 = vadd.f32 %v2657, %v2660
        %2663 = vst [vmem:[%s653] sm:$0xff] %v2662
        %s2664 = sand.u32 %s340, 1
        %s2665 = scalar_lea.sflag [#allocation4], %s2664
        %s2666 = sand.u32 %s340, 1
        %s2667 = smul.addr %s2666, 8
        %s2668 = scalar_lea.vmem [#allocation11], %s2667
        // Predicated region
        $region89: #{_lambda_.1} parent=63 // pred_check
          %p2669 = pneg %p350
        $region90: #{_lambda_.1} parent=63 // pred_check_branch
          %2671 = sbr.rel (%p2669) target = $region92
        $region91: #{_lambda_.1} parent=63 // pred_region
          %s2672 = smul.u32 2, %s38
          %s2674 = ssub.s32 128, 128
          %2675 = vsyncadd %s2665, %s2674
          %s2676 = smul.addr %s2672, 64
          %s2677 = scalar_lea.hbm %s11, %s2676
          %s2679 = sshll.u32 %s2668, 4
          %s2680 = int_to_ptr.vmem [resolvable:$true] %s2679
          %2682 = dma.vmem_to_hbm [thread:$0]  %s2680, 128, %s2677, %s2665
        $region92: #{_lambda_.1} parent=63 // pred_fallthru
          _
      $region64: #{_lambda_.1} parent=5 // pred_fallthru
        _
      %p2683 = scmp.le.s32.totalorder 2, %s29
      // Predicated region
      $region93: #{_lambda_.1} parent=5 // pred_check
        %p2684 = pneg %p2683
      $region94: #{_lambda_.1} parent=5 // pred_check_branch
        %2686 = sbr.rel (%p2684) target = $region96
      $region95: #{_lambda_.1} parent=5 // pred_region
        %s2687 = ssub.s32 %s29, 2
        // Predicated region
        $region97: #{_lambda_.1} parent=95 // pred_check
          %p2688 = pneg %p356
        $region98: #{_lambda_.1} parent=95 // pred_check_branch
          %2690 = sbr.rel (%p2688) target = $region100
        $region99: #{_lambda_.1} parent=95 // pred_region
          %s2691 = sand.u32 %s341, 1
          %s2692 = scalar_lea.sflag [#allocation4], %s2691
          %s2693 = sand.u32 %s341, 1
          %s2694 = smul.addr %s2693, 8
          %s2695 = scalar_lea.vmem [#allocation11], %s2694
          %2696 = dma.done %s2692, 128
        $region100: #{_lambda_.1} parent=95 // pred_fallthru
          _
      $region96: #{_lambda_.1} parent=5 // pred_fallthru
        _
    $region6: #{_lambda_.1} parent=1 // loop_footer
      %s33 = sadd.s32 1, %s29
    $region7: #{_lambda_.1} parent=1 // loop_footer_branch
      %28 = sbr.rel target = $region3
    $region8: #{_lambda_.1} parent=1 // loop_exit
      _
    %2697 = vsyncpa [#allocation3], 1
    %s2698 = scalar_lea.sflag [#allocation3], 1
    %2699 = vsyncpa %s2698, 1
    %2700 = vsyncpa [#allocation6], 1
    %s2701 = scalar_lea.sflag [#allocation6], 1
    %2702 = vsyncpa %s2701, 1
    %2703 = vsyncpa [#allocation9], 1
    %s2704 = scalar_lea.sflag [#allocation9], 1
    %2705 = vsyncpa %s2704, 1
    %2706 = vsyncpa [#allocation4], 1
    %s2707 = scalar_lea.sflag [#allocation4], 1
    %2708 = vsyncpa %s2707, 1

</llo_original>
